<compile_context>
chip_gen: v5e
topology: v5e:2x2
jax: 0.10.0
libtpu: 0.0.40
codegen_flags: <defaults>
</compile_context>

<pallas_src>
import jax
import jax.numpy as jnp
import numpy as np
from jax import lax
from jax.experimental import pallas as pl
from jax.experimental.pallas import tpu as pltpu

THRESH = 0.6
_MM_PREC = lax.Precision.HIGHEST   # exact-f32 matmuls -> exact hard thresholds


def _round_up(x, m):
    return (x + m - 1) // m * m


def _make_snn_kernel(n_win, B, H1p, H2p):
    """Fused SNN recurrence + decoder kernel (all shapes static, padded)."""
    # Full unroll for short windows; partial unroll keeps LLO visibility
    # without code bloat / vreg pressure if n_win grows (real PTB windows).
    unroll = True if n_win <= 16 else 8

    def kernel(emb_ref, fc1_ref, fc2_ref, dec1_ref, dec2_ref, wd_ref, bd_ref,
               out_ref, st1_ref, st2_ref):
        # Phase 0: hoisted layer-1 input projection (no temporal dependence).
        st1_ref[...] = jnp.dot(emb_ref[...], fc1_ref[...],
                               precision=_MM_PREC,
                               preferred_element_type=jnp.float32)

        # Loop-invariant broadcasts (JAX does not CSE broadcast_in_dim).
        decay1 = jnp.broadcast_to(dec1_ref[...], (B, H1p))
        decay2 = jnp.broadcast_to(dec2_ref[...], (B, H2p))

        # Phase 1: layer-1 PLIF recurrence — pure VPU, spike1 staged in-place.
        def step1(t, carry):
            mem, spk = carry
            row = pl.multiple_of(t * B, B)
            mem = jnp.where(spk, 0.0, mem) * decay1 + st1_ref[pl.ds(row, B), :]
            spk = mem - THRESH > 0.0
            st1_ref[pl.ds(row, B), :] = spk.astype(jnp.float32)
            return mem, spk

        lax.fori_loop(0, n_win, step1,
                      (jnp.zeros((B, H1p), jnp.float32),
                       jnp.zeros((B, H1p), jnp.bool_)),
                      unroll=unroll)

        # Phase 2: ONE batched MXU call for all layer-2 input states.
        st2_ref[...] = jnp.dot(st1_ref[...], fc2_ref[...],
                               precision=_MM_PREC,
                               preferred_element_type=jnp.float32)

        # Phase 3: layer-2 PLIF recurrence — pure VPU, spike2 staged in-place.
        def step2(t, carry):
            mem, spk = carry
            row = pl.multiple_of(t * B, B)
            mem = jnp.where(spk, 0.0, mem) * decay2 + st2_ref[pl.ds(row, B), :]
            spk = mem - THRESH > 0.0
            st2_ref[pl.ds(row, B), :] = spk.astype(jnp.float32)
            return mem, spk

        lax.fori_loop(0, n_win, step2,
                      (jnp.zeros((B, H2p), jnp.float32),
                       jnp.zeros((B, H2p), jnp.bool_)),
                      unroll=unroll)

        # Phase 4: hoisted decoder — one matmul + bias, one lane-dense store.
        out_ref[...] = (jnp.dot(st2_ref[...], wd_ref[...],
                                precision=_MM_PREC,
                                preferred_element_type=jnp.float32)
                        + bd_ref[...])

    return kernel


def snn_decode_forward(emb, snn_fc1, snn_fc2, tau_m1, tau_m2, dec_w, dec_b):
    """emb: (n_win, B, ninp) f32. Returns decoded logits (n_win, B, ntoken)."""
    n_win, B, ninp = emb.shape
    H1 = snn_fc1.shape[1]
    H2 = snn_fc2.shape[1]
    ntoken = dec_w.shape[0]

    # Lane-dense padding (multiples of 128). Numerically a no-op: padded hidden
    # columns never spike (state 0), padded decoder rows/cols are zero.
    H1p = _round_up(H1, 128)
    H2p = _round_up(H2, 128)
    Np = _round_up(ntoken, 128)

    f32 = jnp.float32
    emb2d = emb.reshape(n_win * B, ninp).astype(f32)
    fc1 = jnp.pad(snn_fc1.astype(f32), ((0, 0), (0, H1p - H1)))
    fc2 = jnp.pad(snn_fc2.astype(f32), ((0, H1p - H1), (0, H2p - H2)))
    decay1 = jnp.pad(jax.nn.sigmoid(tau_m1).reshape(1, H1).astype(f32),
                     ((0, 0), (0, H1p - H1)))
    decay2 = jnp.pad(jax.nn.sigmoid(tau_m2).reshape(1, H2).astype(f32),
                     ((0, 0), (0, H2p - H2)))
    wd = jnp.pad(dec_w.T.astype(f32), ((0, H2p - H2), (0, Np - ntoken)))
    bd = jnp.pad(dec_b.reshape(1, ntoken).astype(f32), ((0, 0), (0, Np - ntoken)))

    # TODO(synk): at production PTB shapes (ntoken~10k, n_win~70, B>=20) tile
    # the decoder over (row, ntoken) grid axes instead of one full-array block
    # (re-derive against v7x's 64 MiB VMEM), and split the batch across the
    # two v7x TensorCores with a leading "parallel" grid axis.
    grid_spec = pltpu.PrefetchScalarGridSpec(
        num_scalar_prefetch=0,
        grid=(1,),                      # single invocation; time loops in-kernel
        in_specs=[
            pl.BlockSpec((n_win * B, ninp), lambda i: (0, 0)),
            pl.BlockSpec((ninp, H1p), lambda i: (0, 0)),
            pl.BlockSpec((H1p, H2p), lambda i: (0, 0)),
            pl.BlockSpec((1, H1p), lambda i: (0, 0)),
            pl.BlockSpec((1, H2p), lambda i: (0, 0)),
            pl.BlockSpec((H2p, Np), lambda i: (0, 0)),
            pl.BlockSpec((1, Np), lambda i: (0, 0)),
        ],
        out_specs=pl.BlockSpec((n_win * B, Np), lambda i: (0, 0)),
        scratch_shapes=[
            pltpu.VMEM((n_win * B, H1p), jnp.float32),  # layer-1 states -> spike1
            pltpu.VMEM((n_win * B, H2p), jnp.float32),  # layer-2 states -> spike2
        ],
    )

    out2d = pl.pallas_call(
        _make_snn_kernel(n_win, B, H1p, H2p),
        out_shape=jax.ShapeDtypeStruct((n_win * B, Np), jnp.float32),
        grid_spec=grid_spec,
        compiler_params=pltpu.CompilerParams(
            dimension_semantics=("arbitrary",)),
    )(emb2d, fc1, fc2, decay1, decay2, wd, bd)

    return out2d[:, :ntoken].reshape(n_win, B, ntoken)


def nnmodel_forward(raw_input, hidden, params):
    """Mirrors NNModel.forward (snn path, eval mode => dropout identity)."""
    emb = params["encoder_w"][raw_input]          # embedding lookup (glue)
    decoded = snn_decode_forward(
        emb, params["snn_fc1"], params["snn_fc2"],
        params["tau_m1"], params["tau_m2"],
        params["dec_w"], params["dec_b"])
    return decoded, hidden                        # snn_forward returns hidden unchanged


# ---------------- reference (pure JAX) for correctness check ----------------
def _reference(raw_input, params):
    emb = params["encoder_w"][raw_input]
    n_win, B, _ = emb.shape
    H1 = params["snn_fc1"].shape[1]
    H2 = params["snn_fc2"].shape[1]
    d1 = jax.nn.sigmoid(params["tau_m1"])
    d2 = jax.nn.sigmoid(params["tau_m2"])
    h1m = h1s = jnp.zeros((B, H1), jnp.float32)
    h2m = h2s = jnp.zeros((B, H2), jnp.float32)
    buf = []
    for t in range(n_win):
        s1 = jnp.dot(emb[t], params["snn_fc1"], precision=_MM_PREC)
        h1m = h1m * (1 - h1s) * d1 + s1
        h1s = (h1m - THRESH > 0).astype(jnp.float32)
        s2 = jnp.dot(h1s, params["snn_fc2"], precision=_MM_PREC)
        h2m = h2m * (1 - h2s) * d2 + s2
        h2s = (h2m - THRESH > 0).astype(jnp.float32)
        buf.append(h2s)
    spikes = jnp.stack(buf, 0)
    flat = spikes.reshape(n_win * B, H2)
    dec = jnp.dot(flat, params["dec_w"].T, precision=_MM_PREC) + params["dec_b"]
    return dec.reshape(n_win, B, -1)


def _kaiming_uniform(key, shape, fan_in):
    bound = float(np.sqrt(2.0) * np.sqrt(3.0 / fan_in))
    return jax.random.uniform(key, shape, jnp.float32, -bound, bound)


if __name__ == "__main__":
    # small shapes consistent with the module
    ntoken, ninp = 128, 32
    nn_shape = (64, 64)
    n_win, batch = 8, 8

    key = jax.random.PRNGKey(0)
    ks = jax.random.split(key, 8)
    params = {
        "encoder_w": jax.random.uniform(ks[0], (ntoken, ninp), jnp.float32, -0.1, 0.1),
        "snn_fc1": _kaiming_uniform(ks[1], (ninp, nn_shape[0]), ninp),
        "tau_m1": jax.random.uniform(ks[2], (nn_shape[0],), jnp.float32, -1.0, 1.0),
        "snn_fc2": _kaiming_uniform(ks[3], (nn_shape[0], nn_shape[1]), nn_shape[0]),
        "tau_m2": jax.random.uniform(ks[4], (nn_shape[1],), jnp.float32, -1.0, 1.0),
        "dec_w": jax.random.uniform(ks[5], (ntoken, nn_shape[1]), jnp.float32, -0.1, 0.1),
        "dec_b": jnp.zeros((ntoken,), jnp.float32),
    }

    raw_input = jax.random.randint(ks[6], (n_win, batch), 0, ntoken, jnp.int32)
    # init_hidden for 'snn': zero-width placeholders, returned unchanged
    hidden = (jnp.zeros((batch, 0), jnp.float32),) * 4

    decoded, out_hidden = nnmodel_forward(raw_input, hidden, params)
    decoded = jax.block_until_ready(decoded)

    ref = _reference(raw_input, params)
    np.testing.assert_allclose(np.asarray(decoded), np.asarray(ref),
                               rtol=1e-5, atol=1e-5)
    assert decoded.shape == (n_win, batch, ntoken)
    print("KERNEL_OK")
</pallas_src>

<mosaic_0001>
module attributes {stable_mosaic.version = 11 : i64} {
  func.func @kernel(%arg0: i32, %arg1: memref<64x32xf32, #tpu.memory_space<vmem>>, %arg2: memref<32x128xf32, #tpu.memory_space<vmem>>, %arg3: memref<128x128xf32, #tpu.memory_space<vmem>>, %arg4: memref<1x128xf32, #tpu.memory_space<vmem>>, %arg5: memref<1x128xf32, #tpu.memory_space<vmem>>, %arg6: memref<128x128xf32, #tpu.memory_space<vmem>>, %arg7: memref<1x128xf32, #tpu.memory_space<vmem>>, %arg8: memref<64x128xf32, #tpu.memory_space<vmem>>, %arg9: memref<64x128xf32, #tpu.memory_space<vmem>>, %arg10: memref<64x128xf32, #tpu.memory_space<vmem>>) attributes {dimension_semantics = [#tpu.dimension_semantics<arbitrary>], iteration_bounds = array<i64: 1>, scalar_prefetch = 0 : i64, scratch_operands = 2 : i64, tpu.core_type = #tpu.core_type<tc>, window_params = [{pipeline_mode = #tpu.pipeline_mode<synchronous>, transform_indices = @transform_0, window_bounds = array<i64: 64, 32>}, {pipeline_mode = #tpu.pipeline_mode<synchronous>, transform_indices = @transform_1, window_bounds = array<i64: 32, 128>}, {pipeline_mode = #tpu.pipeline_mode<synchronous>, transform_indices = @transform_2, window_bounds = array<i64: 128, 128>}, {pipeline_mode = #tpu.pipeline_mode<synchronous>, transform_indices = @transform_3, window_bounds = array<i64: 1, 128>}, {pipeline_mode = #tpu.pipeline_mode<synchronous>, transform_indices = @transform_4, window_bounds = array<i64: 1, 128>}, {pipeline_mode = #tpu.pipeline_mode<synchronous>, transform_indices = @transform_5, window_bounds = array<i64: 128, 128>}, {pipeline_mode = #tpu.pipeline_mode<synchronous>, transform_indices = @transform_6, window_bounds = array<i64: 1, 128>}, {pipeline_mode = #tpu.pipeline_mode<synchronous>, transform_indices = @transform_7, window_bounds = array<i64: 64, 128>}]} {
    %c0 = arith.constant 0 : index
    %c0_0 = arith.constant 0 : index
    %0 = vector.load %arg1[%c0, %c0_0] : memref<64x32xf32, #tpu.memory_space<vmem>>, vector<64x32xf32>
    %c0_1 = arith.constant 0 : index
    %c0_2 = arith.constant 0 : index
    %1 = vector.load %arg2[%c0_1, %c0_2] : memref<32x128xf32, #tpu.memory_space<vmem>>, vector<32x128xf32>
    %cst = arith.constant dense<0.000000e+00> : vector<64x128xf32>
    %2 = tpu.matmul %0, %1, %cst {dimension_numbers = #tpu.dot_dimension_numbers<[1], [0], [0], [1], [0, 0, 1, 1], [], []>, precision = #tpu.contract_precision<fp32>} : vector<64x32xf32>, vector<32x128xf32>, vector<64x128xf32> -> vector<64x128xf32>
    %c0_3 = arith.constant 0 : index
    %c0_4 = arith.constant 0 : index
    %3 = vector.load %arg9[%c0_3, %c0_4] : memref<64x128xf32, #tpu.memory_space<vmem>>, vector<64x128xf32>
    tpu.vector_store %arg9[%c0_3, %c0_4], %2 {strides = array<i32>} : memref<64x128xf32, #tpu.memory_space<vmem>>, vector<64x128xf32>,
    %c0_5 = arith.constant 0 : index
    %c0_6 = arith.constant 0 : index
    %4 = vector.load %arg4[%c0_5, %c0_6] : memref<1x128xf32, #tpu.memory_space<vmem>>, vector<1x128xf32>
    %5 = vector.shape_cast %4 : vector<1x128xf32> to vector<1x128xf32>
    %6 = vector.broadcast %5 : vector<1x128xf32> to vector<8x128xf32>
    %c0_7 = arith.constant 0 : index
    %c0_8 = arith.constant 0 : index
    %7 = vector.load %arg5[%c0_7, %c0_8] : memref<1x128xf32, #tpu.memory_space<vmem>>, vector<1x128xf32>
    %8 = vector.shape_cast %7 : vector<1x128xf32> to vector<1x128xf32>
    %9 = vector.broadcast %8 : vector<1x128xf32> to vector<8x128xf32>
    %cst_9 = arith.constant 0.000000e+00 : f32
    %10 = vector.broadcast %cst_9 : f32 to vector<8x128xf32>
    %false = arith.constant false
    %11 = vector.broadcast %false : i1 to vector<8x128xi1>
    %c0_i32 = arith.constant 0 : i32
    %c8_i32 = arith.constant 8 : i32
    %12 = arith.muli %c0_i32, %c8_i32 : i32
    %13 = tpu.assume_multiple %12, 8 : i32
    %cst_10 = arith.constant 0.000000e+00 : f32
    %14 = vector.broadcast %cst_10 : f32 to vector<8x128xf32>
    %15 = arith.select %11, %14, %10 : vector<8x128xi1>, vector<8x128xf32>
    %16 = arith.mulf %15, %6 : vector<8x128xf32>
    %17 = arith.index_cast %13 : i32 to index
    %c0_11 = arith.constant 0 : index
    %18 = vector.load %arg9[%17, %c0_11] : memref<64x128xf32, #tpu.memory_space<vmem>>, vector<8x128xf32>
    %19 = arith.addf %16, %18 : vector<8x128xf32>
    %cst_12 = arith.constant 6.000000e-01 : f32
    %20 = vector.broadcast %cst_12 : f32 to vector<8x128xf32>
    %21 = arith.subf %19, %20 : vector<8x128xf32>
    %cst_13 = arith.constant 0.000000e+00 : f32
    %22 = vector.broadcast %cst_13 : f32 to vector<8x128xf32>
    %23 = arith.cmpf ogt, %21, %22 : vector<8x128xf32>
    %24 = arith.extui %23 : vector<8x128xi1> to vector<8x128xi32>
    %25 = arith.sitofp %24 : vector<8x128xi32> to vector<8x128xf32>
    %26 = arith.index_cast %13 : i32 to index
    %c0_14 = arith.constant 0 : index
    %27 = vector.load %arg9[%26, %c0_14] : memref<64x128xf32, #tpu.memory_space<vmem>>, vector<8x128xf32>
    tpu.vector_store %arg9[%26, %c0_14], %25 {strides = array<i32>} : memref<64x128xf32, #tpu.memory_space<vmem>>, vector<8x128xf32>,
    %c1_i32 = arith.constant 1 : i32
    %c8_i32_15 = arith.constant 8 : i32
    %28 = arith.muli %c1_i32, %c8_i32_15 : i32
    %29 = tpu.assume_multiple %28, 8 : i32
    %cst_16 = arith.constant 0.000000e+00 : f32
    %30 = vector.broadcast %cst_16 : f32 to vector<8x128xf32>
    %31 = arith.select %23, %30, %19 : vector<8x128xi1>, vector<8x128xf32>
    %32 = arith.mulf %31, %6 : vector<8x128xf32>
    %33 = arith.index_cast %29 : i32 to index
    %c0_17 = arith.constant 0 : index
    %34 = vector.load %arg9[%33, %c0_17] : memref<64x128xf32, #tpu.memory_space<vmem>>, vector<8x128xf32>
    %35 = arith.addf %32, %34 : vector<8x128xf32>
    %cst_18 = arith.constant 6.000000e-01 : f32
    %36 = vector.broadcast %cst_18 : f32 to vector<8x128xf32>
    %37 = arith.subf %35, %36 : vector<8x128xf32>
    %cst_19 = arith.constant 0.000000e+00 : f32
    %38 = vector.broadcast %cst_19 : f32 to vector<8x128xf32>
    %39 = arith.cmpf ogt, %37, %38 : vector<8x128xf32>
    %40 = arith.extui %39 : vector<8x128xi1> to vector<8x128xi32>
    %41 = arith.sitofp %40 : vector<8x128xi32> to vector<8x128xf32>
    %42 = arith.index_cast %29 : i32 to index
    %c0_20 = arith.constant 0 : index
    %43 = vector.load %arg9[%42, %c0_20] : memref<64x128xf32, #tpu.memory_space<vmem>>, vector<8x128xf32>
    tpu.vector_store %arg9[%42, %c0_20], %41 {strides = array<i32>} : memref<64x128xf32, #tpu.memory_space<vmem>>, vector<8x128xf32>,
    %c2_i32 = arith.constant 2 : i32
    %c8_i32_21 = arith.constant 8 : i32
    %44 = arith.muli %c2_i32, %c8_i32_21 : i32
    %45 = tpu.assume_multiple %44, 8 : i32
    %cst_22 = arith.constant 0.000000e+00 : f32
    %46 = vector.broadcast %cst_22 : f32 to vector<8x128xf32>
    %47 = arith.select %39, %46, %35 : vector<8x128xi1>, vector<8x128xf32>
    %48 = arith.mulf %47, %6 : vector<8x128xf32>
    %49 = arith.index_cast %45 : i32 to index
    %c0_23 = arith.constant 0 : index
    %50 = vector.load %arg9[%49, %c0_23] : memref<64x128xf32, #tpu.memory_space<vmem>>, vector<8x128xf32>
    %51 = arith.addf %48, %50 : vector<8x128xf32>
    %cst_24 = arith.constant 6.000000e-01 : f32
    %52 = vector.broadcast %cst_24 : f32 to vector<8x128xf32>
    %53 = arith.subf %51, %52 : vector<8x128xf32>
    %cst_25 = arith.constant 0.000000e+00 : f32
    %54 = vector.broadcast %cst_25 : f32 to vector<8x128xf32>
    %55 = arith.cmpf ogt, %53, %54 : vector<8x128xf32>
    %56 = arith.extui %55 : vector<8x128xi1> to vector<8x128xi32>
    %57 = arith.sitofp %56 : vector<8x128xi32> to vector<8x128xf32>
    %58 = arith.index_cast %45 : i32 to index
    %c0_26 = arith.constant 0 : index
    %59 = vector.load %arg9[%58, %c0_26] : memref<64x128xf32, #tpu.memory_space<vmem>>, vector<8x128xf32>
    tpu.vector_store %arg9[%58, %c0_26], %57 {strides = array<i32>} : memref<64x128xf32, #tpu.memory_space<vmem>>, vector<8x128xf32>,
    %c3_i32 = arith.constant 3 : i32
    %c8_i32_27 = arith.constant 8 : i32
    %60 = arith.muli %c3_i32, %c8_i32_27 : i32
    %61 = tpu.assume_multiple %60, 8 : i32
    %cst_28 = arith.constant 0.000000e+00 : f32
    %62 = vector.broadcast %cst_28 : f32 to vector<8x128xf32>
    %63 = arith.select %55, %62, %51 : vector<8x128xi1>, vector<8x128xf32>
    %64 = arith.mulf %63, %6 : vector<8x128xf32>
    %65 = arith.index_cast %61 : i32 to index
    %c0_29 = arith.constant 0 : index
    %66 = vector.load %arg9[%65, %c0_29] : memref<64x128xf32, #tpu.memory_space<vmem>>, vector<8x128xf32>
    %67 = arith.addf %64, %66 : vector<8x128xf32>
    %cst_30 = arith.constant 6.000000e-01 : f32
    %68 = vector.broadcast %cst_30 : f32 to vector<8x128xf32>
    %69 = arith.subf %67, %68 : vector<8x128xf32>
    %cst_31 = arith.constant 0.000000e+00 : f32
    %70 = vector.broadcast %cst_31 : f32 to vector<8x128xf32>
    %71 = arith.cmpf ogt, %69, %70 : vector<8x128xf32>
    %72 = arith.extui %71 : vector<8x128xi1> to vector<8x128xi32>
    %73 = arith.sitofp %72 : vector<8x128xi32> to vector<8x128xf32>
    %74 = arith.index_cast %61 : i32 to index
    %c0_32 = arith.constant 0 : index
    %75 = vector.load %arg9[%74, %c0_32] : memref<64x128xf32, #tpu.memory_space<vmem>>, vector<8x128xf32>
    tpu.vector_store %arg9[%74, %c0_32], %73 {strides = array<i32>} : memref<64x128xf32, #tpu.memory_space<vmem>>, vector<8x128xf32>,
    %c4_i32 = arith.constant 4 : i32
    %c8_i32_33 = arith.constant 8 : i32
    %76 = arith.muli %c4_i32, %c8_i32_33 : i32
    %77 = tpu.assume_multiple %76, 8 : i32
    %cst_34 = arith.constant 0.000000e+00 : f32
    %78 = vector.broadcast %cst_34 : f32 to vector<8x128xf32>
    %79 = arith.select %71, %78, %67 : vector<8x128xi1>, vector<8x128xf32>
    %80 = arith.mulf %79, %6 : vector<8x128xf32>
    %81 = arith.index_cast %77 : i32 to index
    %c0_35 = arith.constant 0 : index
    %82 = vector.load %arg9[%81, %c0_35] : memref<64x128xf32, #tpu.memory_space<vmem>>, vector<8x128xf32>
    %83 = arith.addf %80, %82 : vector<8x128xf32>
    %cst_36 = arith.constant 6.000000e-01 : f32
    %84 = vector.broadcast %cst_36 : f32 to vector<8x128xf32>
    %85 = arith.subf %83, %84 : vector<8x128xf32>
    %cst_37 = arith.constant 0.000000e+00 : f32
    %86 = vector.broadcast %cst_37 : f32 to vector<8x128xf32>
    %87 = arith.cmpf ogt, %85, %86 : vector<8x128xf32>
    %88 = arith.extui %87 : vector<8x128xi1> to vector<8x128xi32>
    %89 = arith.sitofp %88 : vector<8x128xi32> to vector<8x128xf32>
    %90 = arith.index_cast %77 : i32 to index
    %c0_38 = arith.constant 0 : index
    %91 = vector.load %arg9[%90, %c0_38] : memref<64x128xf32, #tpu.memory_space<vmem>>, vector<8x128xf32>
    tpu.vector_store %arg9[%90, %c0_38], %89 {strides = array<i32>} : memref<64x128xf32, #tpu.memory_space<vmem>>, vector<8x128xf32>,
    %c5_i32 = arith.constant 5 : i32
    %c8_i32_39 = arith.constant 8 : i32
    %92 = arith.muli %c5_i32, %c8_i32_39 : i32
    %93 = tpu.assume_multiple %92, 8 : i32
    %cst_40 = arith.constant 0.000000e+00 : f32
    %94 = vector.broadcast %cst_40 : f32 to vector<8x128xf32>
    %95 = arith.select %87, %94, %83 : vector<8x128xi1>, vector<8x128xf32>
    %96 = arith.mulf %95, %6 : vector<8x128xf32>
    %97 = arith.index_cast %93 : i32 to index
    %c0_41 = arith.constant 0 : index
    %98 = vector.load %arg9[%97, %c0_41] : memref<64x128xf32, #tpu.memory_space<vmem>>, vector<8x128xf32>
    %99 = arith.addf %96, %98 : vector<8x128xf32>
    %cst_42 = arith.constant 6.000000e-01 : f32
    %100 = vector.broadcast %cst_42 : f32 to vector<8x128xf32>
    %101 = arith.subf %99, %100 : vector<8x128xf32>
    %cst_43 = arith.constant 0.000000e+00 : f32
    %102 = vector.broadcast %cst_43 : f32 to vector<8x128xf32>
    %103 = arith.cmpf ogt, %101, %102 : vector<8x128xf32>
    %104 = arith.extui %103 : vector<8x128xi1> to vector<8x128xi32>
    %105 = arith.sitofp %104 : vector<8x128xi32> to vector<8x128xf32>
    %106 = arith.index_cast %93 : i32 to index
    %c0_44 = arith.constant 0 : index
    %107 = vector.load %arg9[%106, %c0_44] : memref<64x128xf32, #tpu.memory_space<vmem>>, vector<8x128xf32>
    tpu.vector_store %arg9[%106, %c0_44], %105 {strides = array<i32>} : memref<64x128xf32, #tpu.memory_space<vmem>>, vector<8x128xf32>,
    %c6_i32 = arith.constant 6 : i32
    %c8_i32_45 = arith.constant 8 : i32
    %108 = arith.muli %c6_i32, %c8_i32_45 : i32
    %109 = tpu.assume_multiple %108, 8 : i32
    %cst_46 = arith.constant 0.000000e+00 : f32
    %110 = vector.broadcast %cst_46 : f32 to vector<8x128xf32>
    %111 = arith.select %103, %110, %99 : vector<8x128xi1>, vector<8x128xf32>
    %112 = arith.mulf %111, %6 : vector<8x128xf32>
    %113 = arith.index_cast %109 : i32 to index
    %c0_47 = arith.constant 0 : index
    %114 = vector.load %arg9[%113, %c0_47] : memref<64x128xf32, #tpu.memory_space<vmem>>, vector<8x128xf32>
    %115 = arith.addf %112, %114 : vector<8x128xf32>
    %cst_48 = arith.constant 6.000000e-01 : f32
    %116 = vector.broadcast %cst_48 : f32 to vector<8x128xf32>
    %117 = arith.subf %115, %116 : vector<8x128xf32>
    %cst_49 = arith.constant 0.000000e+00 : f32
    %118 = vector.broadcast %cst_49 : f32 to vector<8x128xf32>
    %119 = arith.cmpf ogt, %117, %118 : vector<8x128xf32>
    %120 = arith.extui %119 : vector<8x128xi1> to vector<8x128xi32>
    %121 = arith.sitofp %120 : vector<8x128xi32> to vector<8x128xf32>
    %122 = arith.index_cast %109 : i32 to index
    %c0_50 = arith.constant 0 : index
    %123 = vector.load %arg9[%122, %c0_50] : memref<64x128xf32, #tpu.memory_space<vmem>>, vector<8x128xf32>
    tpu.vector_store %arg9[%122, %c0_50], %121 {strides = array<i32>} : memref<64x128xf32, #tpu.memory_space<vmem>>, vector<8x128xf32>,
    %c7_i32 = arith.constant 7 : i32
    %c8_i32_51 = arith.constant 8 : i32
    %124 = arith.muli %c7_i32, %c8_i32_51 : i32
    %125 = tpu.assume_multiple %124, 8 : i32
    %cst_52 = arith.constant 0.000000e+00 : f32
    %126 = vector.broadcast %cst_52 : f32 to vector<8x128xf32>
    %127 = arith.select %119, %126, %115 : vector<8x128xi1>, vector<8x128xf32>
    %128 = arith.mulf %127, %6 : vector<8x128xf32>
    %129 = arith.index_cast %125 : i32 to index
    %c0_53 = arith.constant 0 : index
    %130 = vector.load %arg9[%129, %c0_53] : memref<64x128xf32, #tpu.memory_space<vmem>>, vector<8x128xf32>
    %131 = arith.addf %128, %130 : vector<8x128xf32>
    %cst_54 = arith.constant 6.000000e-01 : f32
    %132 = vector.broadcast %cst_54 : f32 to vector<8x128xf32>
    %133 = arith.subf %131, %132 : vector<8x128xf32>
    %cst_55 = arith.constant 0.000000e+00 : f32
    %134 = vector.broadcast %cst_55 : f32 to vector<8x128xf32>
    %135 = arith.cmpf ogt, %133, %134 : vector<8x128xf32>
    %136 = arith.extui %135 : vector<8x128xi1> to vector<8x128xi32>
    %137 = arith.sitofp %136 : vector<8x128xi32> to vector<8x128xf32>
    %138 = arith.index_cast %125 : i32 to index
    %c0_56 = arith.constant 0 : index
    %139 = vector.load %arg9[%138, %c0_56] : memref<64x128xf32, #tpu.memory_space<vmem>>, vector<8x128xf32>
    tpu.vector_store %arg9[%138, %c0_56], %137 {strides = array<i32>} : memref<64x128xf32, #tpu.memory_space<vmem>>, vector<8x128xf32>,
    %c8_i32_57 = arith.constant 8 : i32
    %c0_58 = arith.constant 0 : index
    %c0_59 = arith.constant 0 : index
    %140 = vector.load %arg9[%c0_58, %c0_59] : memref<64x128xf32, #tpu.memory_space<vmem>>, vector<64x128xf32>
    %c0_60 = arith.constant 0 : index
    %c0_61 = arith.constant 0 : index
    %141 = vector.load %arg3[%c0_60, %c0_61] : memref<128x128xf32, #tpu.memory_space<vmem>>, vector<128x128xf32>
    %cst_62 = arith.constant dense<0.000000e+00> : vector<64x128xf32>
    %142 = tpu.matmul %140, %141, %cst_62 {dimension_numbers = #tpu.dot_dimension_numbers<[1], [0], [0], [1], [0, 0, 1, 1], [], []>, precision = #tpu.contract_precision<fp32>} : vector<64x128xf32>, vector<128x128xf32>, vector<64x128xf32> -> vector<64x128xf32>
    %c0_63 = arith.constant 0 : index
    %c0_64 = arith.constant 0 : index
    %143 = vector.load %arg10[%c0_63, %c0_64] : memref<64x128xf32, #tpu.memory_space<vmem>>, vector<64x128xf32>
    tpu.vector_store %arg10[%c0_63, %c0_64], %142 {strides = array<i32>} : memref<64x128xf32, #tpu.memory_space<vmem>>, vector<64x128xf32>,
    %cst_65 = arith.constant 0.000000e+00 : f32
    %144 = vector.broadcast %cst_65 : f32 to vector<8x128xf32>
    %false_66 = arith.constant false
    %145 = vector.broadcast %false_66 : i1 to vector<8x128xi1>
    %c0_i32_67 = arith.constant 0 : i32
    %c8_i32_68 = arith.constant 8 : i32
    %146 = arith.muli %c0_i32_67, %c8_i32_68 : i32
    %147 = tpu.assume_multiple %146, 8 : i32
    %cst_69 = arith.constant 0.000000e+00 : f32
    %148 = vector.broadcast %cst_69 : f32 to vector<8x128xf32>
    %149 = arith.select %145, %148, %144 : vector<8x128xi1>, vector<8x128xf32>
    %150 = arith.mulf %149, %9 : vector<8x128xf32>
    %151 = arith.index_cast %147 : i32 to index
    %c0_70 = arith.constant 0 : index
    %152 = vector.load %arg10[%151, %c0_70] : memref<64x128xf32, #tpu.memory_space<vmem>>, vector<8x128xf32>
    %153 = arith.addf %150, %152 : vector<8x128xf32>
    %cst_71 = arith.constant 6.000000e-01 : f32
    %154 = vector.broadcast %cst_71 : f32 to vector<8x128xf32>
    %155 = arith.subf %153, %154 : vector<8x128xf32>
    %cst_72 = arith.constant 0.000000e+00 : f32
    %156 = vector.broadcast %cst_72 : f32 to vector<8x128xf32>
    %157 = arith.cmpf ogt, %155, %156 : vector<8x128xf32>
    %158 = arith.extui %157 : vector<8x128xi1> to vector<8x128xi32>
    %159 = arith.sitofp %158 : vector<8x128xi32> to vector<8x128xf32>
    %160 = arith.index_cast %147 : i32 to index
    %c0_73 = arith.constant 0 : index
    %161 = vector.load %arg10[%160, %c0_73] : memref<64x128xf32, #tpu.memory_space<vmem>>, vector<8x128xf32>
    tpu.vector_store %arg10[%160, %c0_73], %159 {strides = array<i32>} : memref<64x128xf32, #tpu.memory_space<vmem>>, vector<8x128xf32>,
    %c1_i32_74 = arith.constant 1 : i32
    %c8_i32_75 = arith.constant 8 : i32
    %162 = arith.muli %c1_i32_74, %c8_i32_75 : i32
    %163 = tpu.assume_multiple %162, 8 : i32
    %cst_76 = arith.constant 0.000000e+00 : f32
    %164 = vector.broadcast %cst_76 : f32 to vector<8x128xf32>
    %165 = arith.select %157, %164, %153 : vector<8x128xi1>, vector<8x128xf32>
    %166 = arith.mulf %165, %9 : vector<8x128xf32>
    %167 = arith.index_cast %163 : i32 to index
    %c0_77 = arith.constant 0 : index
    %168 = vector.load %arg10[%167, %c0_77] : memref<64x128xf32, #tpu.memory_space<vmem>>, vector<8x128xf32>
    %169 = arith.addf %166, %168 : vector<8x128xf32>
    %cst_78 = arith.constant 6.000000e-01 : f32
    %170 = vector.broadcast %cst_78 : f32 to vector<8x128xf32>
    %171 = arith.subf %169, %170 : vector<8x128xf32>
    %cst_79 = arith.constant 0.000000e+00 : f32
    %172 = vector.broadcast %cst_79 : f32 to vector<8x128xf32>
    %173 = arith.cmpf ogt, %171, %172 : vector<8x128xf32>
    %174 = arith.extui %173 : vector<8x128xi1> to vector<8x128xi32>
    %175 = arith.sitofp %174 : vector<8x128xi32> to vector<8x128xf32>
    %176 = arith.index_cast %163 : i32 to index
    %c0_80 = arith.constant 0 : index
    %177 = vector.load %arg10[%176, %c0_80] : memref<64x128xf32, #tpu.memory_space<vmem>>, vector<8x128xf32>
    tpu.vector_store %arg10[%176, %c0_80], %175 {strides = array<i32>} : memref<64x128xf32, #tpu.memory_space<vmem>>, vector<8x128xf32>,
    %c2_i32_81 = arith.constant 2 : i32
    %c8_i32_82 = arith.constant 8 : i32
    %178 = arith.muli %c2_i32_81, %c8_i32_82 : i32
    %179 = tpu.assume_multiple %178, 8 : i32
    %cst_83 = arith.constant 0.000000e+00 : f32
    %180 = vector.broadcast %cst_83 : f32 to vector<8x128xf32>
    %181 = arith.select %173, %180, %169 : vector<8x128xi1>, vector<8x128xf32>
    %182 = arith.mulf %181, %9 : vector<8x128xf32>
    %183 = arith.index_cast %179 : i32 to index
    %c0_84 = arith.constant 0 : index
    %184 = vector.load %arg10[%183, %c0_84] : memref<64x128xf32, #tpu.memory_space<vmem>>, vector<8x128xf32>
    %185 = arith.addf %182, %184 : vector<8x128xf32>
    %cst_85 = arith.constant 6.000000e-01 : f32
    %186 = vector.broadcast %cst_85 : f32 to vector<8x128xf32>
    %187 = arith.subf %185, %186 : vector<8x128xf32>
    %cst_86 = arith.constant 0.000000e+00 : f32
    %188 = vector.broadcast %cst_86 : f32 to vector<8x128xf32>
    %189 = arith.cmpf ogt, %187, %188 : vector<8x128xf32>
    %190 = arith.extui %189 : vector<8x128xi1> to vector<8x128xi32>
    %191 = arith.sitofp %190 : vector<8x128xi32> to vector<8x128xf32>
    %192 = arith.index_cast %179 : i32 to index
    %c0_87 = arith.constant 0 : index
    %193 = vector.load %arg10[%192, %c0_87] : memref<64x128xf32, #tpu.memory_space<vmem>>, vector<8x128xf32>
    tpu.vector_store %arg10[%192, %c0_87], %191 {strides = array<i32>} : memref<64x128xf32, #tpu.memory_space<vmem>>, vector<8x128xf32>,
    %c3_i32_88 = arith.constant 3 : i32
    %c8_i32_89 = arith.constant 8 : i32
    %194 = arith.muli %c3_i32_88, %c8_i32_89 : i32
    %195 = tpu.assume_multiple %194, 8 : i32
    %cst_90 = arith.constant 0.000000e+00 : f32
    %196 = vector.broadcast %cst_90 : f32 to vector<8x128xf32>
    %197 = arith.select %189, %196, %185 : vector<8x128xi1>, vector<8x128xf32>
    %198 = arith.mulf %197, %9 : vector<8x128xf32>
    %199 = arith.index_cast %195 : i32 to index
    %c0_91 = arith.constant 0 : index
    %200 = vector.load %arg10[%199, %c0_91] : memref<64x128xf32, #tpu.memory_space<vmem>>, vector<8x128xf32>
    %201 = arith.addf %198, %200 : vector<8x128xf32>
    %cst_92 = arith.constant 6.000000e-01 : f32
    %202 = vector.broadcast %cst_92 : f32 to vector<8x128xf32>
    %203 = arith.subf %201, %202 : vector<8x128xf32>
    %cst_93 = arith.constant 0.000000e+00 : f32
    %204 = vector.broadcast %cst_93 : f32 to vector<8x128xf32>
    %205 = arith.cmpf ogt, %203, %204 : vector<8x128xf32>
    %206 = arith.extui %205 : vector<8x128xi1> to vector<8x128xi32>
    %207 = arith.sitofp %206 : vector<8x128xi32> to vector<8x128xf32>
    %208 = arith.index_cast %195 : i32 to index
    %c0_94 = arith.constant 0 : index
    %209 = vector.load %arg10[%208, %c0_94] : memref<64x128xf32, #tpu.memory_space<vmem>>, vector<8x128xf32>
    tpu.vector_store %arg10[%208, %c0_94], %207 {strides = array<i32>} : memref<64x128xf32, #tpu.memory_space<vmem>>, vector<8x128xf32>,
    %c4_i32_95 = arith.constant 4 : i32
    %c8_i32_96 = arith.constant 8 : i32
    %210 = arith.muli %c4_i32_95, %c8_i32_96 : i32
    %211 = tpu.assume_multiple %210, 8 : i32
    %cst_97 = arith.constant 0.000000e+00 : f32
    %212 = vector.broadcast %cst_97 : f32 to vector<8x128xf32>
    %213 = arith.select %205, %212, %201 : vector<8x128xi1>, vector<8x128xf32>
    %214 = arith.mulf %213, %9 : vector<8x128xf32>
    %215 = arith.index_cast %211 : i32 to index
    %c0_98 = arith.constant 0 : index
    %216 = vector.load %arg10[%215, %c0_98] : memref<64x128xf32, #tpu.memory_space<vmem>>, vector<8x128xf32>
    %217 = arith.addf %214, %216 : vector<8x128xf32>
    %cst_99 = arith.constant 6.000000e-01 : f32
    %218 = vector.broadcast %cst_99 : f32 to vector<8x128xf32>
    %219 = arith.subf %217, %218 : vector<8x128xf32>
    %cst_100 = arith.constant 0.000000e+00 : f32
    %220 = vector.broadcast %cst_100 : f32 to vector<8x128xf32>
    %221 = arith.cmpf ogt, %219, %220 : vector<8x128xf32>
    %222 = arith.extui %221 : vector<8x128xi1> to vector<8x128xi32>
    %223 = arith.sitofp %222 : vector<8x128xi32> to vector<8x128xf32>
    %224 = arith.index_cast %211 : i32 to index
    %c0_101 = arith.constant 0 : index
    %225 = vector.load %arg10[%224, %c0_101] : memref<64x128xf32, #tpu.memory_space<vmem>>, vector<8x128xf32>
    tpu.vector_store %arg10[%224, %c0_101], %223 {strides = array<i32>} : memref<64x128xf32, #tpu.memory_space<vmem>>, vector<8x128xf32>,
    %c5_i32_102 = arith.constant 5 : i32
    %c8_i32_103 = arith.constant 8 : i32
    %226 = arith.muli %c5_i32_102, %c8_i32_103 : i32
    %227 = tpu.assume_multiple %226, 8 : i32
    %cst_104 = arith.constant 0.000000e+00 : f32
    %228 = vector.broadcast %cst_104 : f32 to vector<8x128xf32>
    %229 = arith.select %221, %228, %217 : vector<8x128xi1>, vector<8x128xf32>
    %230 = arith.mulf %229, %9 : vector<8x128xf32>
    %231 = arith.index_cast %227 : i32 to index
    %c0_105 = arith.constant 0 : index
    %232 = vector.load %arg10[%231, %c0_105] : memref<64x128xf32, #tpu.memory_space<vmem>>, vector<8x128xf32>
    %233 = arith.addf %230, %232 : vector<8x128xf32>
    %cst_106 = arith.constant 6.000000e-01 : f32
    %234 = vector.broadcast %cst_106 : f32 to vector<8x128xf32>
    %235 = arith.subf %233, %234 : vector<8x128xf32>
    %cst_107 = arith.constant 0.000000e+00 : f32
    %236 = vector.broadcast %cst_107 : f32 to vector<8x128xf32>
    %237 = arith.cmpf ogt, %235, %236 : vector<8x128xf32>
    %238 = arith.extui %237 : vector<8x128xi1> to vector<8x128xi32>
    %239 = arith.sitofp %238 : vector<8x128xi32> to vector<8x128xf32>
    %240 = arith.index_cast %227 : i32 to index
    %c0_108 = arith.constant 0 : index
    %241 = vector.load %arg10[%240, %c0_108] : memref<64x128xf32, #tpu.memory_space<vmem>>, vector<8x128xf32>
    tpu.vector_store %arg10[%240, %c0_108], %239 {strides = array<i32>} : memref<64x128xf32, #tpu.memory_space<vmem>>, vector<8x128xf32>,
    %c6_i32_109 = arith.constant 6 : i32
    %c8_i32_110 = arith.constant 8 : i32
    %242 = arith.muli %c6_i32_109, %c8_i32_110 : i32
    %243 = tpu.assume_multiple %242, 8 : i32
    %cst_111 = arith.constant 0.000000e+00 : f32
    %244 = vector.broadcast %cst_111 : f32 to vector<8x128xf32>
    %245 = arith.select %237, %244, %233 : vector<8x128xi1>, vector<8x128xf32>
    %246 = arith.mulf %245, %9 : vector<8x128xf32>
    %247 = arith.index_cast %243 : i32 to index
    %c0_112 = arith.constant 0 : index
    %248 = vector.load %arg10[%247, %c0_112] : memref<64x128xf32, #tpu.memory_space<vmem>>, vector<8x128xf32>
    %249 = arith.addf %246, %248 : vector<8x128xf32>
    %cst_113 = arith.constant 6.000000e-01 : f32
    %250 = vector.broadcast %cst_113 : f32 to vector<8x128xf32>
    %251 = arith.subf %249, %250 : vector<8x128xf32>
    %cst_114 = arith.constant 0.000000e+00 : f32
    %252 = vector.broadcast %cst_114 : f32 to vector<8x128xf32>
    %253 = arith.cmpf ogt, %251, %252 : vector<8x128xf32>
    %254 = arith.extui %253 : vector<8x128xi1> to vector<8x128xi32>
    %255 = arith.sitofp %254 : vector<8x128xi32> to vector<8x128xf32>
    %256 = arith.index_cast %243 : i32 to index
    %c0_115 = arith.constant 0 : index
    %257 = vector.load %arg10[%256, %c0_115] : memref<64x128xf32, #tpu.memory_space<vmem>>, vector<8x128xf32>
    tpu.vector_store %arg10[%256, %c0_115], %255 {strides = array<i32>} : memref<64x128xf32, #tpu.memory_space<vmem>>, vector<8x128xf32>,
    %c7_i32_116 = arith.constant 7 : i32
    %c8_i32_117 = arith.constant 8 : i32
    %258 = arith.muli %c7_i32_116, %c8_i32_117 : i32
    %259 = tpu.assume_multiple %258, 8 : i32
    %cst_118 = arith.constant 0.000000e+00 : f32
    %260 = vector.broadcast %cst_118 : f32 to vector<8x128xf32>
    %261 = arith.select %253, %260, %249 : vector<8x128xi1>, vector<8x128xf32>
    %262 = arith.mulf %261, %9 : vector<8x128xf32>
    %263 = arith.index_cast %259 : i32 to index
    %c0_119 = arith.constant 0 : index
    %264 = vector.load %arg10[%263, %c0_119] : memref<64x128xf32, #tpu.memory_space<vmem>>, vector<8x128xf32>
    %265 = arith.addf %262, %264 : vector<8x128xf32>
    %cst_120 = arith.constant 6.000000e-01 : f32
    %266 = vector.broadcast %cst_120 : f32 to vector<8x128xf32>
    %267 = arith.subf %265, %266 : vector<8x128xf32>
    %cst_121 = arith.constant 0.000000e+00 : f32
    %268 = vector.broadcast %cst_121 : f32 to vector<8x128xf32>
    %269 = arith.cmpf ogt, %267, %268 : vector<8x128xf32>
    %270 = arith.extui %269 : vector<8x128xi1> to vector<8x128xi32>
    %271 = arith.sitofp %270 : vector<8x128xi32> to vector<8x128xf32>
    %272 = arith.index_cast %259 : i32 to index
    %c0_122 = arith.constant 0 : index
    %273 = vector.load %arg10[%272, %c0_122] : memref<64x128xf32, #tpu.memory_space<vmem>>, vector<8x128xf32>
    tpu.vector_store %arg10[%272, %c0_122], %271 {strides = array<i32>} : memref<64x128xf32, #tpu.memory_space<vmem>>, vector<8x128xf32>,
    %c8_i32_123 = arith.constant 8 : i32
    %c0_124 = arith.constant 0 : index
    %c0_125 = arith.constant 0 : index
    %274 = vector.load %arg10[%c0_124, %c0_125] : memref<64x128xf32, #tpu.memory_space<vmem>>, vector<64x128xf32>
    %c0_126 = arith.constant 0 : index
    %c0_127 = arith.constant 0 : index
    %275 = vector.load %arg6[%c0_126, %c0_127] : memref<128x128xf32, #tpu.memory_space<vmem>>, vector<128x128xf32>
    %cst_128 = arith.constant dense<0.000000e+00> : vector<64x128xf32>
    %276 = tpu.matmul %274, %275, %cst_128 {dimension_numbers = #tpu.dot_dimension_numbers<[1], [0], [0], [1], [0, 0, 1, 1], [], []>, precision = #tpu.contract_precision<fp32>} : vector<64x128xf32>, vector<128x128xf32>, vector<64x128xf32> -> vector<64x128xf32>
    %c0_129 = arith.constant 0 : index
    %c0_130 = arith.constant 0 : index
    %277 = vector.load %arg7[%c0_129, %c0_130] : memref<1x128xf32, #tpu.memory_space<vmem>>, vector<1x128xf32>
    %278 = vector.broadcast %277 : vector<1x128xf32> to vector<64x128xf32>
    %279 = arith.addf %276, %278 : vector<64x128xf32>
    %c0_131 = arith.constant 0 : index
    %c0_132 = arith.constant 0 : index
    %280 = vector.load %arg8[%c0_131, %c0_132] : memref<64x128xf32, #tpu.memory_space<vmem>>, vector<64x128xf32>
    tpu.vector_store %arg8[%c0_131, %c0_132], %279 {strides = array<i32>} : memref<64x128xf32, #tpu.memory_space<vmem>>, vector<64x128xf32>,
    return
  }
  func.func @transform_0(%arg0: i32) -> (i32, i32) {
    %c0_i32 = arith.constant 0 : i32
    %c0_i32_0 = arith.constant 0 : i32
    %c0_i32_1 = arith.constant 0 : i32
    return %c0_i32, %c0_i32_0 : i32, i32
  }
  func.func @transform_1(%arg0: i32) -> (i32, i32) {
    %c0_i32 = arith.constant 0 : i32
    %c0_i32_0 = arith.constant 0 : i32
    %c0_i32_1 = arith.constant 0 : i32
    return %c0_i32, %c0_i32_0 : i32, i32
  }
  func.func @transform_2(%arg0: i32) -> (i32, i32) {
    %c0_i32 = arith.constant 0 : i32
    %c0_i32_0 = arith.constant 0 : i32
    %c0_i32_1 = arith.constant 0 : i32
    return %c0_i32, %c0_i32_0 : i32, i32
  }
  func.func @transform_3(%arg0: i32) -> (i32, i32) {
    %c0_i32 = arith.constant 0 : i32
    %c0_i32_0 = arith.constant 0 : i32
    %c0_i32_1 = arith.constant 0 : i32
    return %c0_i32, %c0_i32_0 : i32, i32
  }
  func.func @transform_4(%arg0: i32) -> (i32, i32) {
    %c0_i32 = arith.constant 0 : i32
    %c0_i32_0 = arith.constant 0 : i32
    %c0_i32_1 = arith.constant 0 : i32
    return %c0_i32, %c0_i32_0 : i32, i32
  }
  func.func @transform_5(%arg0: i32) -> (i32, i32) {
    %c0_i32 = arith.constant 0 : i32
    %c0_i32_0 = arith.constant 0 : i32
    %c0_i32_1 = arith.constant 0 : i32
    return %c0_i32, %c0_i32_0 : i32, i32
  }
  func.func @transform_6(%arg0: i32) -> (i32, i32) {
    %c0_i32 = arith.constant 0 : i32
    %c0_i32_0 = arith.constant 0 : i32
    %c0_i32_1 = arith.constant 0 : i32
    return %c0_i32, %c0_i32_0 : i32, i32
  }
  func.func @transform_7(%arg0: i32) -> (i32, i32) {
    %c0_i32 = arith.constant 0 : i32
    %c0_i32_0 = arith.constant 0 : i32
    %c0_i32_1 = arith.constant 0 : i32
    return %c0_i32, %c0_i32_0 : i32, i32
  }
}

</mosaic_0001>

<llo_original>
// kernel: tpu_custom_call.1
$region0: #{tpu_custom_call.1}
  #allocation0 [shape = 'u32[]', space=smem, size = 0x4, offset = 0x4, fixed_abs, tag = 'smem constant byte address 0x4 - core index']
  #allocation1 [shape = 'u32[72,128]{1,0:T(1,128)}', space=vmem, size = 0x9000, scoped, tag = 'internal scratch']
  #allocation2 [shape = 'f32[64,128]{1,0:T(8,128)}', space=vmem, size = 0x8000, scoped, tag = 'scratch operand']
  #allocation3 [shape = 'f32[64,128]{1,0:T(8,128)}', space=vmem, size = 0x8000, scoped, tag = 'scratch operand']
  %s0 = inlined_call_operand.vmem [shape: f32[64,32], index: 0, kind: input, shape index: {}]
  %s1 = inlined_call_operand.vmem [shape: f32[32,128], index: 1, kind: input, shape index: {}]
  %s2 = inlined_call_operand.hbm [shape: f32[128,128], index: 2, kind: input, shape index: {}]
  %s3 = inlined_call_operand.vmem [shape: f32[1,128], index: 3, kind: input, shape index: {}]
  %s4 = inlined_call_operand.vmem [shape: f32[1,128], index: 4, kind: input, shape index: {}]
  %s5 = inlined_call_operand.hbm [shape: f32[128,128], index: 5, kind: input, shape index: {}]
  %s6 = inlined_call_operand.vmem [shape: f32[1,128], index: 6, kind: input, shape index: {}]
  %s7 = inlined_call_operand.hbm [shape: f32[64,128], index: 7, kind: output, shape index: {}]
  %s8 = sld [smem:[#allocation0]]
  $region46: #{tpu_custom_call.1} parent=0
    _
  %s10 = ssub.s32 1, %s8
  %s11 = scalar_select 0, %s10, %s8
  $region1: #{tpu_custom_call.1} parent=0
    #allocation4 [shape = 'u8[65536]{0}', space=vmem, size = 0x10000, scoped, tag = 'input window, operand 2, single buffered']
    #allocation5 [shape = 's32[1]{0}', space=sflag, size = 0x4, scoped, tag = 'scoped memory for tpu_custom_call.1']
    #allocation6 [shape = 's32[1]{0}', space=sflag, size = 0x4, scoped, tag = 'scoped memory for tpu_custom_call.1']
    #allocation7 [shape = 'u8[65536]{0}', space=vmem, size = 0x10000, scoped, tag = 'input window, operand 5, single buffered']
    #allocation8 [shape = 's32[1]{0}', space=sflag, size = 0x4, scoped, tag = 'scoped memory for tpu_custom_call.1']
    #allocation9 [shape = 'u8[32768]{0}', space=vmem, size = 0x8000, scoped, tag = 'output window, operand 0, single buffered']
    %12 = vsyncpa [#allocation5], 0
    %13 = vsyncpa [#allocation8], 0
    %14 = vsyncpa [#allocation6], 0
    // Predicated region
    $region2: #{tpu_custom_call.1} parent=1 // pred_check
      _
    $region3: #{tpu_custom_call.1} parent=1 // pred_check_branch
      %16 = sbr.rel (0) target = $region5
    $region4: #{tpu_custom_call.1} parent=1 // pred_region
      _
    $region5: #{tpu_custom_call.1} parent=1 // pred_fallthru
      _
    // Predicated region
    $region6: #{tpu_custom_call.1} parent=1 // pred_check
      _
    $region7: #{tpu_custom_call.1} parent=1 // pred_check_branch
      %18 = sbr.rel (0) target = $region9
    $region8: #{tpu_custom_call.1} parent=1 // pred_region
      _
    $region9: #{tpu_custom_call.1} parent=1 // pred_fallthru
      _
    // Predicated region
    $region10: #{tpu_custom_call.1} parent=1 // pred_check
      _
    $region11: #{tpu_custom_call.1} parent=1 // pred_check_branch
      %20 = sbr.rel (0) target = $region13
    $region12: #{tpu_custom_call.1} parent=1 // pred_region
      %22 = vsyncadd [#allocation5], 0
      %s23 = sshll.u32 %s2, 4
      %s24 = int_to_ptr.hbm [resolvable:$true] %s23
      %s25 = sshll.u32 [#allocation4], 4
      %s26 = int_to_ptr.vmem [resolvable:$true] %s25
      %31 = dma.hbm_to_vmem [thread:$0]  %s24, 2048, %s26, [#allocation5], 128, 128, 8
    $region13: #{tpu_custom_call.1} parent=1 // pred_fallthru
      _
    // Predicated region
    $region14: #{tpu_custom_call.1} parent=1 // pred_check
      _
    $region15: #{tpu_custom_call.1} parent=1 // pred_check_branch
      %33 = sbr.rel (0) target = $region17
    $region16: #{tpu_custom_call.1} parent=1 // pred_region
      _
    $region17: #{tpu_custom_call.1} parent=1 // pred_fallthru
      _
    // Predicated region
    $region18: #{tpu_custom_call.1} parent=1 // pred_check
      _
    $region19: #{tpu_custom_call.1} parent=1 // pred_check_branch
      %35 = sbr.rel (0) target = $region21
    $region20: #{tpu_custom_call.1} parent=1 // pred_region
      _
    $region21: #{tpu_custom_call.1} parent=1 // pred_fallthru
      _
    // Predicated region
    $region22: #{tpu_custom_call.1} parent=1 // pred_check
      _
    $region23: #{tpu_custom_call.1} parent=1 // pred_check_branch
      %37 = sbr.rel (0) target = $region25
    $region24: #{tpu_custom_call.1} parent=1 // pred_region
      %39 = vsyncadd [#allocation8], 0
      %s40 = sshll.u32 %s5, 4
      %s41 = int_to_ptr.hbm [resolvable:$true] %s40
      %s42 = sshll.u32 [#allocation7], 4
      %s43 = int_to_ptr.vmem [resolvable:$true] %s42
      %48 = dma.hbm_to_vmem [thread:$0]  %s41, 2048, %s43, [#allocation8], 128, 128, 8
    $region25: #{tpu_custom_call.1} parent=1 // pred_fallthru
      _
    // Predicated region
    $region26: #{tpu_custom_call.1} parent=1 // pred_check
      _
    $region27: #{tpu_custom_call.1} parent=1 // pred_check_branch
      %50 = sbr.rel (0) target = $region29
    $region28: #{tpu_custom_call.1} parent=1 // pred_region
      _
    $region29: #{tpu_custom_call.1} parent=1 // pred_fallthru
      _
    // Predicated region
    $region30: #{tpu_custom_call.1} parent=1 // pred_check
      _
    $region31: #{tpu_custom_call.1} parent=1 // pred_check_branch
      %52 = sbr.rel (0) target = $region33
    $region32: #{tpu_custom_call.1} parent=1 // pred_region
      %54 = dma.done [#allocation5], 2048
    $region33: #{tpu_custom_call.1} parent=1 // pred_fallthru
      _
    // Predicated region
    $region34: #{tpu_custom_call.1} parent=1 // pred_check
      _
    $region35: #{tpu_custom_call.1} parent=1 // pred_check_branch
      %56 = sbr.rel (0) target = $region37
    $region36: #{tpu_custom_call.1} parent=1 // pred_region
      %58 = dma.done [#allocation8], 2048
    $region37: #{tpu_custom_call.1} parent=1 // pred_fallthru
      _
    %v59 = vld [vmem:[%s0] sm:$0xff]
    %v60 = vld [vmem:[%s0 + $0x8] sm:$0xff]
    %v61 = vld [vmem:[%s0 + $0x10] sm:$0xff]
    %v62 = vld [vmem:[%s0 + $0x18] sm:$0xff]
    %v63 = vld [vmem:[%s0 + $0x20] sm:$0xff]
    %v64 = vld [vmem:[%s0 + $0x28] sm:$0xff]
    %v65 = vld [vmem:[%s0 + $0x30] sm:$0xff]
    %v66 = vld [vmem:[%s0 + $0x38] sm:$0xff]
    %v67 = vld [vmem:[%s1] sm:$0xff]
    %v68 = vld [vmem:[%s1 + $0x8] sm:$0xff]
    %v69 = vld [vmem:[%s1 + $0x10] sm:$0xff]
    %v70 = vld [vmem:[%s1 + $0x18] sm:$0xff]
    %vm71 = vcmask 261120
    %v73 = vsel %vm71, %v59, 0
    %v76 = vsel %vm71, %v60, 0
    %v79 = vsel %vm71, %v61, 0
    %v82 = vsel %vm71, %v62, 0
    %v85 = vsel %vm71, %v63, 0
    %v88 = vsel %vm71, %v64, 0
    %v91 = vsel %vm71, %v65, 0
    %v94 = vsel %vm71, %v66, 0
    %96 = vmatpush.msra.mxu0 0.0
    %97 = vmatpush.msra.mxu0 0.0
    %98 = vmatpush.msra.mxu0 0.0
    %99 = vmatpush.msra.mxu0 0.0
    %100 = vmatpush.msra.mxu0 0.0
    %101 = vmatpush.msra.mxu0 0.0
    %102 = vmatpush.msra.mxu0 0.0
    %103 = vmatpush.msra.mxu0 0.0
    %104 = vmatpush.msra.mxu0 0.0
    %105 = vmatpush.msra.mxu0 0.0
    %106 = vmatpush.msra.mxu0 0.0
    %107 = vmatpush.msra.mxu0 0.0
    %v108 = vand.u32 %v70, 4294901760
    %109 = vmatpush.msra.mxu0 %v108
    %v110 = vand.u32 %v69, 4294901760
    %111 = vmatpush.msra.mxu0 %v110
    %v112 = vand.u32 %v68, 4294901760
    %113 = vmatpush.msra.mxu0 %v112
    %v114 = vand.u32 %v67, 4294901760
    %115 = vmatpush.msra.mxu0 %v114
    %v116 = vand.u32 %v73, 4294901760
    %v117 = vsub.f32 %v73, %v116
    %v118 = vand.u32 %v117, 4294901760
    %v119 = vsub.f32 %v117, %v118
    %v120 = vand.u32 %v119, 4294901760
    %121 = vmatmul.f32.gmra.mxu0 %v120
    %v122 = vpop.f32.mrf.mxu0
    %v123 = vadd.f32 0.0, %v122
    %v124 = vand.u32 %v76, 4294901760
    %v125 = vsub.f32 %v76, %v124
    %v126 = vand.u32 %v125, 4294901760
    %v127 = vsub.f32 %v125, %v126
    %v128 = vand.u32 %v127, 4294901760
    %129 = vmatmul.f32.gmra.mxu0 %v128
    %v130 = vpop.f32.mrf.mxu0
    %v131 = vadd.f32 0.0, %v130
    %v132 = vand.u32 %v79, 4294901760
    %v133 = vsub.f32 %v79, %v132
    %v134 = vand.u32 %v133, 4294901760
    %v135 = vsub.f32 %v133, %v134
    %v136 = vand.u32 %v135, 4294901760
    %137 = vmatmul.f32.gmra.mxu0 %v136
    %v138 = vpop.f32.mrf.mxu0
    %v139 = vadd.f32 0.0, %v138
    %v140 = vand.u32 %v82, 4294901760
    %v141 = vsub.f32 %v82, %v140
    %v142 = vand.u32 %v141, 4294901760
    %v143 = vsub.f32 %v141, %v142
    %v144 = vand.u32 %v143, 4294901760
    %145 = vmatmul.f32.gmra.mxu0 %v144
    %v146 = vpop.f32.mrf.mxu0
    %v147 = vadd.f32 0.0, %v146
    %v148 = vand.u32 %v85, 4294901760
    %v149 = vsub.f32 %v85, %v148
    %v150 = vand.u32 %v149, 4294901760
    %v151 = vsub.f32 %v149, %v150
    %v152 = vand.u32 %v151, 4294901760
    %153 = vmatmul.f32.gmra.mxu0 %v152
    %v154 = vpop.f32.mrf.mxu0
    %v155 = vadd.f32 0.0, %v154
    %v156 = vand.u32 %v88, 4294901760
    %v157 = vsub.f32 %v88, %v156
    %v158 = vand.u32 %v157, 4294901760
    %v159 = vsub.f32 %v157, %v158
    %v160 = vand.u32 %v159, 4294901760
    %161 = vmatmul.f32.gmra.mxu0 %v160
    %v162 = vpop.f32.mrf.mxu0
    %v163 = vadd.f32 0.0, %v162
    %v164 = vand.u32 %v91, 4294901760
    %v165 = vsub.f32 %v91, %v164
    %v166 = vand.u32 %v165, 4294901760
    %v167 = vsub.f32 %v165, %v166
    %v168 = vand.u32 %v167, 4294901760
    %169 = vmatmul.f32.gmra.mxu0 %v168
    %v170 = vpop.f32.mrf.mxu0
    %v171 = vadd.f32 0.0, %v170
    %v172 = vand.u32 %v94, 4294901760
    %v173 = vsub.f32 %v94, %v172
    %v174 = vand.u32 %v173, 4294901760
    %v175 = vsub.f32 %v173, %v174
    %v176 = vand.u32 %v175, 4294901760
    %177 = vmatmul.f32.gmra.mxu0 %v176
    %v178 = vpop.f32.mrf.mxu0
    %v179 = vadd.f32 0.0, %v178
    %180 = vdwg.mxu0
    %181 = vmatpush.msra.mxu0 0.0
    %182 = vmatpush.msra.mxu0 0.0
    %183 = vmatpush.msra.mxu0 0.0
    %184 = vmatpush.msra.mxu0 0.0
    %185 = vmatpush.msra.mxu0 0.0
    %186 = vmatpush.msra.mxu0 0.0
    %187 = vmatpush.msra.mxu0 0.0
    %188 = vmatpush.msra.mxu0 0.0
    %189 = vmatpush.msra.mxu0 0.0
    %190 = vmatpush.msra.mxu0 0.0
    %191 = vmatpush.msra.mxu0 0.0
    %192 = vmatpush.msra.mxu0 0.0
    %v193 = vand.u32 %v70, 4294901760
    %v194 = vsub.f32 %v70, %v193
    %v195 = vand.u32 %v194, 4294901760
    %v196 = vsub.f32 %v194, %v195
    %v197 = vand.u32 %v196, 4294901760
    %198 = vmatpush.msra.mxu0 %v197
    %v199 = vand.u32 %v69, 4294901760
    %v200 = vsub.f32 %v69, %v199
    %v201 = vand.u32 %v200, 4294901760
    %v202 = vsub.f32 %v200, %v201
    %v203 = vand.u32 %v202, 4294901760
    %204 = vmatpush.msra.mxu0 %v203
    %v205 = vand.u32 %v68, 4294901760
    %v206 = vsub.f32 %v68, %v205
    %v207 = vand.u32 %v206, 4294901760
    %v208 = vsub.f32 %v206, %v207
    %v209 = vand.u32 %v208, 4294901760
    %210 = vmatpush.msra.mxu0 %v209
    %v211 = vand.u32 %v67, 4294901760
    %v212 = vsub.f32 %v67, %v211
    %v213 = vand.u32 %v212, 4294901760
    %v214 = vsub.f32 %v212, %v213
    %v215 = vand.u32 %v214, 4294901760
    %216 = vmatpush.msra.mxu0 %v215
    %v217 = vand.u32 %v73, 4294901760
    %218 = vmatmul.f32.gmra.mxu0 %v217
    %v219 = vpop.f32.mrf.mxu0
    %v220 = vadd.f32 %v123, %v219
    %v221 = vand.u32 %v76, 4294901760
    %222 = vmatmul.f32.gmra.mxu0 %v221
    %v223 = vpop.f32.mrf.mxu0
    %v224 = vadd.f32 %v131, %v223
    %v225 = vand.u32 %v79, 4294901760
    %226 = vmatmul.f32.gmra.mxu0 %v225
    %v227 = vpop.f32.mrf.mxu0
    %v228 = vadd.f32 %v139, %v227
    %v229 = vand.u32 %v82, 4294901760
    %230 = vmatmul.f32.gmra.mxu0 %v229
    %v231 = vpop.f32.mrf.mxu0
    %v232 = vadd.f32 %v147, %v231
    %v233 = vand.u32 %v85, 4294901760
    %234 = vmatmul.f32.gmra.mxu0 %v233
    %v235 = vpop.f32.mrf.mxu0
    %v236 = vadd.f32 %v155, %v235
    %v237 = vand.u32 %v88, 4294901760
    %238 = vmatmul.f32.gmra.mxu0 %v237
    %v239 = vpop.f32.mrf.mxu0
    %v240 = vadd.f32 %v163, %v239
    %v241 = vand.u32 %v91, 4294901760
    %242 = vmatmul.f32.gmra.mxu0 %v241
    %v243 = vpop.f32.mrf.mxu0
    %v244 = vadd.f32 %v171, %v243
    %v245 = vand.u32 %v94, 4294901760
    %246 = vmatmul.f32.gmra.mxu0 %v245
    %v247 = vpop.f32.mrf.mxu0
    %v248 = vadd.f32 %v179, %v247
    %249 = vdwg.mxu0
    %250 = vmatpush.msra.mxu0 0.0
    %251 = vmatpush.msra.mxu0 0.0
    %252 = vmatpush.msra.mxu0 0.0
    %253 = vmatpush.msra.mxu0 0.0
    %254 = vmatpush.msra.mxu0 0.0
    %255 = vmatpush.msra.mxu0 0.0
    %256 = vmatpush.msra.mxu0 0.0
    %257 = vmatpush.msra.mxu0 0.0
    %258 = vmatpush.msra.mxu0 0.0
    %259 = vmatpush.msra.mxu0 0.0
    %260 = vmatpush.msra.mxu0 0.0
    %261 = vmatpush.msra.mxu0 0.0
    %v262 = vand.u32 %v70, 4294901760
    %v263 = vsub.f32 %v70, %v262
    %264 = vmatpush.msra.mxu0 %v263
    %v265 = vand.u32 %v69, 4294901760
    %v266 = vsub.f32 %v69, %v265
    %267 = vmatpush.msra.mxu0 %v266
    %v268 = vand.u32 %v68, 4294901760
    %v269 = vsub.f32 %v68, %v268
    %270 = vmatpush.msra.mxu0 %v269
    %v271 = vand.u32 %v67, 4294901760
    %v272 = vsub.f32 %v67, %v271
    %273 = vmatpush.msra.mxu0 %v272
    %v274 = vand.u32 %v73, 4294901760
    %v275 = vsub.f32 %v73, %v274
    %276 = vmatmul.f32.gmra.mxu0 %v275
    %v277 = vpop.f32.mrf.mxu0
    %v278 = vadd.f32 %v220, %v277
    %v279 = vand.u32 %v76, 4294901760
    %v280 = vsub.f32 %v76, %v279
    %281 = vmatmul.f32.gmra.mxu0 %v280
    %v282 = vpop.f32.mrf.mxu0
    %v283 = vadd.f32 %v224, %v282
    %v284 = vand.u32 %v79, 4294901760
    %v285 = vsub.f32 %v79, %v284
    %286 = vmatmul.f32.gmra.mxu0 %v285
    %v287 = vpop.f32.mrf.mxu0
    %v288 = vadd.f32 %v228, %v287
    %v289 = vand.u32 %v82, 4294901760
    %v290 = vsub.f32 %v82, %v289
    %291 = vmatmul.f32.gmra.mxu0 %v290
    %v292 = vpop.f32.mrf.mxu0
    %v293 = vadd.f32 %v232, %v292
    %v294 = vand.u32 %v85, 4294901760
    %v295 = vsub.f32 %v85, %v294
    %296 = vmatmul.f32.gmra.mxu0 %v295
    %v297 = vpop.f32.mrf.mxu0
    %v298 = vadd.f32 %v236, %v297
    %v299 = vand.u32 %v88, 4294901760
    %v300 = vsub.f32 %v88, %v299
    %301 = vmatmul.f32.gmra.mxu0 %v300
    %v302 = vpop.f32.mrf.mxu0
    %v303 = vadd.f32 %v240, %v302
    %v304 = vand.u32 %v91, 4294901760
    %v305 = vsub.f32 %v91, %v304
    %306 = vmatmul.f32.gmra.mxu0 %v305
    %v307 = vpop.f32.mrf.mxu0
    %v308 = vadd.f32 %v244, %v307
    %v309 = vand.u32 %v94, 4294901760
    %v310 = vsub.f32 %v94, %v309
    %311 = vmatmul.f32.gmra.mxu0 %v310
    %v312 = vpop.f32.mrf.mxu0
    %v313 = vadd.f32 %v248, %v312
    %314 = vdwg.mxu0
    %315 = vmatpush.msra.mxu0 0.0
    %316 = vmatpush.msra.mxu0 0.0
    %317 = vmatpush.msra.mxu0 0.0
    %318 = vmatpush.msra.mxu0 0.0
    %319 = vmatpush.msra.mxu0 0.0
    %320 = vmatpush.msra.mxu0 0.0
    %321 = vmatpush.msra.mxu0 0.0
    %322 = vmatpush.msra.mxu0 0.0
    %323 = vmatpush.msra.mxu0 0.0
    %324 = vmatpush.msra.mxu0 0.0
    %325 = vmatpush.msra.mxu0 0.0
    %326 = vmatpush.msra.mxu0 0.0
    %v327 = vand.u32 %v70, 4294901760
    %328 = vmatpush.msra.mxu0 %v327
    %v329 = vand.u32 %v69, 4294901760
    %330 = vmatpush.msra.mxu0 %v329
    %v331 = vand.u32 %v68, 4294901760
    %332 = vmatpush.msra.mxu0 %v331
    %v333 = vand.u32 %v67, 4294901760
    %334 = vmatpush.msra.mxu0 %v333
    %v335 = vand.u32 %v73, 4294901760
    %v336 = vsub.f32 %v73, %v335
    %v337 = vand.u32 %v336, 4294901760
    %338 = vmatmul.f32.gmra.mxu0 %v337
    %v339 = vpop.f32.mrf.mxu0
    %v340 = vadd.f32 %v278, %v339
    %v341 = vand.u32 %v76, 4294901760
    %v342 = vsub.f32 %v76, %v341
    %v343 = vand.u32 %v342, 4294901760
    %344 = vmatmul.f32.gmra.mxu0 %v343
    %v345 = vpop.f32.mrf.mxu0
    %v346 = vadd.f32 %v283, %v345
    %v347 = vand.u32 %v79, 4294901760
    %v348 = vsub.f32 %v79, %v347
    %v349 = vand.u32 %v348, 4294901760
    %350 = vmatmul.f32.gmra.mxu0 %v349
    %v351 = vpop.f32.mrf.mxu0
    %v352 = vadd.f32 %v288, %v351
    %v353 = vand.u32 %v82, 4294901760
    %v354 = vsub.f32 %v82, %v353
    %v355 = vand.u32 %v354, 4294901760
    %356 = vmatmul.f32.gmra.mxu0 %v355
    %v357 = vpop.f32.mrf.mxu0
    %v358 = vadd.f32 %v293, %v357
    %v359 = vand.u32 %v85, 4294901760
    %v360 = vsub.f32 %v85, %v359
    %v361 = vand.u32 %v360, 4294901760
    %362 = vmatmul.f32.gmra.mxu0 %v361
    %v363 = vpop.f32.mrf.mxu0
    %v364 = vadd.f32 %v298, %v363
    %v365 = vand.u32 %v88, 4294901760
    %v366 = vsub.f32 %v88, %v365
    %v367 = vand.u32 %v366, 4294901760
    %368 = vmatmul.f32.gmra.mxu0 %v367
    %v369 = vpop.f32.mrf.mxu0
    %v370 = vadd.f32 %v303, %v369
    %v371 = vand.u32 %v91, 4294901760
    %v372 = vsub.f32 %v91, %v371
    %v373 = vand.u32 %v372, 4294901760
    %374 = vmatmul.f32.gmra.mxu0 %v373
    %v375 = vpop.f32.mrf.mxu0
    %v376 = vadd.f32 %v308, %v375
    %v377 = vand.u32 %v94, 4294901760
    %v378 = vsub.f32 %v94, %v377
    %v379 = vand.u32 %v378, 4294901760
    %380 = vmatmul.f32.gmra.mxu0 %v379
    %v381 = vpop.f32.mrf.mxu0
    %v382 = vadd.f32 %v313, %v381
    %383 = vdwg.mxu0
    %384 = vmatpush.msra.mxu0 0.0
    %385 = vmatpush.msra.mxu0 0.0
    %386 = vmatpush.msra.mxu0 0.0
    %387 = vmatpush.msra.mxu0 0.0
    %388 = vmatpush.msra.mxu0 0.0
    %389 = vmatpush.msra.mxu0 0.0
    %390 = vmatpush.msra.mxu0 0.0
    %391 = vmatpush.msra.mxu0 0.0
    %392 = vmatpush.msra.mxu0 0.0
    %393 = vmatpush.msra.mxu0 0.0
    %394 = vmatpush.msra.mxu0 0.0
    %395 = vmatpush.msra.mxu0 0.0
    %v396 = vand.u32 %v70, 4294901760
    %v397 = vsub.f32 %v70, %v396
    %v398 = vand.u32 %v397, 4294901760
    %399 = vmatpush.msra.mxu0 %v398
    %v400 = vand.u32 %v69, 4294901760
    %v401 = vsub.f32 %v69, %v400
    %v402 = vand.u32 %v401, 4294901760
    %403 = vmatpush.msra.mxu0 %v402
    %v404 = vand.u32 %v68, 4294901760
    %v405 = vsub.f32 %v68, %v404
    %v406 = vand.u32 %v405, 4294901760
    %407 = vmatpush.msra.mxu0 %v406
    %v408 = vand.u32 %v67, 4294901760
    %v409 = vsub.f32 %v67, %v408
    %v410 = vand.u32 %v409, 4294901760
    %411 = vmatpush.msra.mxu0 %v410
    %v412 = vand.u32 %v73, 4294901760
    %413 = vmatmul.f32.gmra.mxu0 %v412
    %v414 = vpop.f32.mrf.mxu0
    %v415 = vadd.f32 %v340, %v414
    %v416 = vand.u32 %v76, 4294901760
    %417 = vmatmul.f32.gmra.mxu0 %v416
    %v418 = vpop.f32.mrf.mxu0
    %v419 = vadd.f32 %v346, %v418
    %v420 = vand.u32 %v79, 4294901760
    %421 = vmatmul.f32.gmra.mxu0 %v420
    %v422 = vpop.f32.mrf.mxu0
    %v423 = vadd.f32 %v352, %v422
    %v424 = vand.u32 %v82, 4294901760
    %425 = vmatmul.f32.gmra.mxu0 %v424
    %v426 = vpop.f32.mrf.mxu0
    %v427 = vadd.f32 %v358, %v426
    %v428 = vand.u32 %v85, 4294901760
    %429 = vmatmul.f32.gmra.mxu0 %v428
    %v430 = vpop.f32.mrf.mxu0
    %v431 = vadd.f32 %v364, %v430
    %v432 = vand.u32 %v88, 4294901760
    %433 = vmatmul.f32.gmra.mxu0 %v432
    %v434 = vpop.f32.mrf.mxu0
    %v435 = vadd.f32 %v370, %v434
    %v436 = vand.u32 %v91, 4294901760
    %437 = vmatmul.f32.gmra.mxu0 %v436
    %v438 = vpop.f32.mrf.mxu0
    %v439 = vadd.f32 %v376, %v438
    %v440 = vand.u32 %v94, 4294901760
    %441 = vmatmul.f32.gmra.mxu0 %v440
    %v442 = vpop.f32.mrf.mxu0
    %v443 = vadd.f32 %v382, %v442
    %444 = vdwg.mxu0
    %445 = vmatpush.msra.mxu0 0.0
    %446 = vmatpush.msra.mxu0 0.0
    %447 = vmatpush.msra.mxu0 0.0
    %448 = vmatpush.msra.mxu0 0.0
    %449 = vmatpush.msra.mxu0 0.0
    %450 = vmatpush.msra.mxu0 0.0
    %451 = vmatpush.msra.mxu0 0.0
    %452 = vmatpush.msra.mxu0 0.0
    %453 = vmatpush.msra.mxu0 0.0
    %454 = vmatpush.msra.mxu0 0.0
    %455 = vmatpush.msra.mxu0 0.0
    %456 = vmatpush.msra.mxu0 0.0
    %v457 = vand.u32 %v70, 4294901760
    %458 = vmatpush.msra.mxu0 %v457
    %v459 = vand.u32 %v69, 4294901760
    %460 = vmatpush.msra.mxu0 %v459
    %v461 = vand.u32 %v68, 4294901760
    %462 = vmatpush.msra.mxu0 %v461
    %v463 = vand.u32 %v67, 4294901760
    %464 = vmatpush.msra.mxu0 %v463
    %v465 = vand.u32 %v73, 4294901760
    %466 = vmatmul.f32.gmra.mxu0 %v465
    %v467 = vpop.f32.mrf.mxu0
    %v468 = vadd.f32 %v415, %v467
    %v469 = vand.u32 %v76, 4294901760
    %470 = vmatmul.f32.gmra.mxu0 %v469
    %v471 = vpop.f32.mrf.mxu0
    %v472 = vadd.f32 %v419, %v471
    %v473 = vand.u32 %v79, 4294901760
    %474 = vmatmul.f32.gmra.mxu0 %v473
    %v475 = vpop.f32.mrf.mxu0
    %v476 = vadd.f32 %v423, %v475
    %v477 = vand.u32 %v82, 4294901760
    %478 = vmatmul.f32.gmra.mxu0 %v477
    %v479 = vpop.f32.mrf.mxu0
    %v480 = vadd.f32 %v427, %v479
    %v481 = vand.u32 %v85, 4294901760
    %482 = vmatmul.f32.gmra.mxu0 %v481
    %v483 = vpop.f32.mrf.mxu0
    %v484 = vadd.f32 %v431, %v483
    %v485 = vand.u32 %v88, 4294901760
    %486 = vmatmul.f32.gmra.mxu0 %v485
    %v487 = vpop.f32.mrf.mxu0
    %v488 = vadd.f32 %v435, %v487
    %v489 = vand.u32 %v91, 4294901760
    %490 = vmatmul.f32.gmra.mxu0 %v489
    %v491 = vpop.f32.mrf.mxu0
    %v492 = vadd.f32 %v439, %v491
    %v493 = vand.u32 %v94, 4294901760
    %494 = vmatmul.f32.gmra.mxu0 %v493
    %v495 = vpop.f32.mrf.mxu0
    %v496 = vadd.f32 %v443, %v495
    %497 = vdwg.mxu0
    %498 = vst [vmem:[#allocation2] sm:$0xff] %v468
    %499 = vst [vmem:[#allocation2 + $0x8] sm:$0xff] %v472
    %500 = vst [vmem:[#allocation2 + $0x10] sm:$0xff] %v476
    %501 = vst [vmem:[#allocation2 + $0x18] sm:$0xff] %v480
    %502 = vst [vmem:[#allocation2 + $0x20] sm:$0xff] %v484
    %503 = vst [vmem:[#allocation2 + $0x28] sm:$0xff] %v488
    %504 = vst [vmem:[#allocation2 + $0x30] sm:$0xff] %v492
    %505 = vst [vmem:[#allocation2 + $0x38] sm:$0xff] %v496
    %v506 = vld [vmem:[%s3] sm:$0x1]
    %v508 = vperm.slane %v506, 0
    %v510 = vld [vmem:[%s4] sm:$0x1]
    %v512 = vperm.slane %v510, 0
    %v514 = vmul.f32 %v508, 0.0
    %v515 = vld [vmem:[#allocation2] sm:$0xff]
    %v516 = vadd.f32 %v514, %v515
    %v517 = vsub.f32 %v516, 0.6
    %vm518 = vcmp.gt.f32.partialorder %v517, 0.0
    %v519 = vsel %vm518, 1, 0
    %v520 = vcvt.s32.f32 %v519
    %521 = vst [vmem:[#allocation2] sm:$0xff] %v520
    %v522 = vsel %vm518, 0.0, %v516
    %v523 = vmul.f32 %v522, %v508
    %s524 = scalar_lea.vmem [#allocation2], 8
    %v525 = vld [vmem:[%s524] sm:$0xff]
    %v526 = vadd.f32 %v523, %v525
    %v527 = vsub.f32 %v526, 0.6
    %vm528 = vcmp.gt.f32.partialorder %v527, 0.0
    %v529 = vsel %vm528, 1, 0
    %v530 = vcvt.s32.f32 %v529
    %531 = vst [vmem:[%s524] sm:$0xff] %v530
    %v532 = vsel %vm528, 0.0, %v526
    %v533 = vmul.f32 %v532, %v508
    %s534 = scalar_lea.vmem [#allocation2], 16
    %v535 = vld [vmem:[%s534] sm:$0xff]
    %v536 = vadd.f32 %v533, %v535
    %v537 = vsub.f32 %v536, 0.6
    %vm538 = vcmp.gt.f32.partialorder %v537, 0.0
    %v539 = vsel %vm538, 1, 0
    %v540 = vcvt.s32.f32 %v539
    %541 = vst [vmem:[%s534] sm:$0xff] %v540
    %v542 = vsel %vm538, 0.0, %v536
    %v543 = vmul.f32 %v542, %v508
    %s544 = scalar_lea.vmem [#allocation2], 24
    %v545 = vld [vmem:[%s544] sm:$0xff]
    %v546 = vadd.f32 %v543, %v545
    %v547 = vsub.f32 %v546, 0.6
    %vm548 = vcmp.gt.f32.partialorder %v547, 0.0
    %v549 = vsel %vm548, 1, 0
    %v550 = vcvt.s32.f32 %v549
    %551 = vst [vmem:[%s544] sm:$0xff] %v550
    %v552 = vsel %vm548, 0.0, %v546
    %v553 = vmul.f32 %v552, %v508
    %s554 = scalar_lea.vmem [#allocation2], 32
    %v555 = vld [vmem:[%s554] sm:$0xff]
    %v556 = vadd.f32 %v553, %v555
    %v557 = vsub.f32 %v556, 0.6
    %vm558 = vcmp.gt.f32.partialorder %v557, 0.0
    %v559 = vsel %vm558, 1, 0
    %v560 = vcvt.s32.f32 %v559
    %561 = vst [vmem:[%s554] sm:$0xff] %v560
    %v562 = vsel %vm558, 0.0, %v556
    %v563 = vmul.f32 %v562, %v508
    %s564 = scalar_lea.vmem [#allocation2], 40
    %v565 = vld [vmem:[%s564] sm:$0xff]
    %v566 = vadd.f32 %v563, %v565
    %v567 = vsub.f32 %v566, 0.6
    %vm568 = vcmp.gt.f32.partialorder %v567, 0.0
    %v569 = vsel %vm568, 1, 0
    %v570 = vcvt.s32.f32 %v569
    %571 = vst [vmem:[%s564] sm:$0xff] %v570
    %v572 = vsel %vm568, 0.0, %v566
    %v573 = vmul.f32 %v572, %v508
    %s574 = scalar_lea.vmem [#allocation2], 48
    %v575 = vld [vmem:[%s574] sm:$0xff]
    %v576 = vadd.f32 %v573, %v575
    %v577 = vsub.f32 %v576, 0.6
    %vm578 = vcmp.gt.f32.partialorder %v577, 0.0
    %v579 = vsel %vm578, 1, 0
    %v580 = vcvt.s32.f32 %v579
    %581 = vst [vmem:[%s574] sm:$0xff] %v580
    %v582 = vsel %vm578, 0.0, %v576
    %v583 = vmul.f32 %v582, %v508
    %s584 = scalar_lea.vmem [#allocation2], 56
    %v585 = vld [vmem:[%s584] sm:$0xff]
    %v586 = vadd.f32 %v583, %v585
    %v587 = vsub.f32 %v586, 0.6
    %vm588 = vcmp.gt.f32.partialorder %v587, 0.0
    %v589 = vsel %vm588, 1, 0
    %v590 = vcvt.s32.f32 %v589
    %591 = vst [vmem:[%s584] sm:$0xff] %v590
    %v592 = vld [vmem:[#allocation2] sm:$0xff]
    %v593 = vld [vmem:[#allocation2 + $0x8] sm:$0xff]
    %v594 = vld [vmem:[#allocation2 + $0x10] sm:$0xff]
    %v595 = vld [vmem:[#allocation2 + $0x18] sm:$0xff]
    %v596 = vld [vmem:[#allocation2 + $0x20] sm:$0xff]
    %v597 = vld [vmem:[#allocation2 + $0x28] sm:$0xff]
    %v598 = vld [vmem:[#allocation2 + $0x30] sm:$0xff]
    %v599 = vld [vmem:[#allocation2 + $0x38] sm:$0xff]
    %v600 = vld [vmem:[#allocation4] sm:$0xff]
    %v601 = vld [vmem:[#allocation4 + $0x8] sm:$0xff]
    %v602 = vld [vmem:[#allocation4 + $0x10] sm:$0xff]
    %v603 = vld [vmem:[#allocation4 + $0x18] sm:$0xff]
    %v604 = vld [vmem:[#allocation4 + $0x20] sm:$0xff]
    %v605 = vld [vmem:[#allocation4 + $0x28] sm:$0xff]
    %v606 = vld [vmem:[#allocation4 + $0x30] sm:$0xff]
    %v607 = vld [vmem:[#allocation4 + $0x38] sm:$0xff]
    %v608 = vld [vmem:[#allocation4 + $0x40] sm:$0xff]
    %v609 = vld [vmem:[#allocation4 + $0x48] sm:$0xff]
    %v610 = vld [vmem:[#allocation4 + $0x50] sm:$0xff]
    %v611 = vld [vmem:[#allocation4 + $0x58] sm:$0xff]
    %v612 = vld [vmem:[#allocation4 + $0x60] sm:$0xff]
    %v613 = vld [vmem:[#allocation4 + $0x68] sm:$0xff]
    %v614 = vld [vmem:[#allocation4 + $0x70] sm:$0xff]
    %v615 = vld [vmem:[#allocation4 + $0x78] sm:$0xff]
    %v616 = vand.u32 %v615, 4294901760
    %617 = vmatpush.msra.mxu0 %v616
    %v618 = vand.u32 %v614, 4294901760
    %619 = vmatpush.msra.mxu0 %v618
    %v620 = vand.u32 %v613, 4294901760
    %621 = vmatpush.msra.mxu0 %v620
    %v622 = vand.u32 %v612, 4294901760
    %623 = vmatpush.msra.mxu0 %v622
    %v624 = vand.u32 %v611, 4294901760
    %625 = vmatpush.msra.mxu0 %v624
    %v626 = vand.u32 %v610, 4294901760
    %627 = vmatpush.msra.mxu0 %v626
    %v628 = vand.u32 %v609, 4294901760
    %629 = vmatpush.msra.mxu0 %v628
    %v630 = vand.u32 %v608, 4294901760
    %631 = vmatpush.msra.mxu0 %v630
    %v632 = vand.u32 %v607, 4294901760
    %633 = vmatpush.msra.mxu0 %v632
    %v634 = vand.u32 %v606, 4294901760
    %635 = vmatpush.msra.mxu0 %v634
    %v636 = vand.u32 %v605, 4294901760
    %637 = vmatpush.msra.mxu0 %v636
    %v638 = vand.u32 %v604, 4294901760
    %639 = vmatpush.msra.mxu0 %v638
    %v640 = vand.u32 %v603, 4294901760
    %641 = vmatpush.msra.mxu0 %v640
    %v642 = vand.u32 %v602, 4294901760
    %643 = vmatpush.msra.mxu0 %v642
    %v644 = vand.u32 %v601, 4294901760
    %645 = vmatpush.msra.mxu0 %v644
    %v646 = vand.u32 %v600, 4294901760
    %647 = vmatpush.msra.mxu0 %v646
    %v648 = vand.u32 %v592, 4294901760
    %v649 = vsub.f32 %v592, %v648
    %v650 = vand.u32 %v649, 4294901760
    %v651 = vsub.f32 %v649, %v650
    %v652 = vand.u32 %v651, 4294901760
    %653 = vmatmul.f32.gmra.mxu0 %v652
    %v654 = vpop.f32.mrf.mxu0
    %v655 = vadd.f32 0.0, %v654
    %v656 = vand.u32 %v593, 4294901760
    %v657 = vsub.f32 %v593, %v656
    %v658 = vand.u32 %v657, 4294901760
    %v659 = vsub.f32 %v657, %v658
    %v660 = vand.u32 %v659, 4294901760
    %661 = vmatmul.f32.gmra.mxu0 %v660
    %v662 = vpop.f32.mrf.mxu0
    %v663 = vadd.f32 0.0, %v662
    %v664 = vand.u32 %v594, 4294901760
    %v665 = vsub.f32 %v594, %v664
    %v666 = vand.u32 %v665, 4294901760
    %v667 = vsub.f32 %v665, %v666
    %v668 = vand.u32 %v667, 4294901760
    %669 = vmatmul.f32.gmra.mxu0 %v668
    %v670 = vpop.f32.mrf.mxu0
    %v671 = vadd.f32 0.0, %v670
    %v672 = vand.u32 %v595, 4294901760
    %v673 = vsub.f32 %v595, %v672
    %v674 = vand.u32 %v673, 4294901760
    %v675 = vsub.f32 %v673, %v674
    %v676 = vand.u32 %v675, 4294901760
    %677 = vmatmul.f32.gmra.mxu0 %v676
    %v678 = vpop.f32.mrf.mxu0
    %v679 = vadd.f32 0.0, %v678
    %v680 = vand.u32 %v596, 4294901760
    %v681 = vsub.f32 %v596, %v680
    %v682 = vand.u32 %v681, 4294901760
    %v683 = vsub.f32 %v681, %v682
    %v684 = vand.u32 %v683, 4294901760
    %685 = vmatmul.f32.gmra.mxu0 %v684
    %v686 = vpop.f32.mrf.mxu0
    %v687 = vadd.f32 0.0, %v686
    %v688 = vand.u32 %v597, 4294901760
    %v689 = vsub.f32 %v597, %v688
    %v690 = vand.u32 %v689, 4294901760
    %v691 = vsub.f32 %v689, %v690
    %v692 = vand.u32 %v691, 4294901760
    %693 = vmatmul.f32.gmra.mxu0 %v692
    %v694 = vpop.f32.mrf.mxu0
    %v695 = vadd.f32 0.0, %v694
    %v696 = vand.u32 %v598, 4294901760
    %v697 = vsub.f32 %v598, %v696
    %v698 = vand.u32 %v697, 4294901760
    %v699 = vsub.f32 %v697, %v698
    %v700 = vand.u32 %v699, 4294901760
    %701 = vmatmul.f32.gmra.mxu0 %v700
    %v702 = vpop.f32.mrf.mxu0
    %v703 = vadd.f32 0.0, %v702
    %v704 = vand.u32 %v599, 4294901760
    %v705 = vsub.f32 %v599, %v704
    %v706 = vand.u32 %v705, 4294901760
    %v707 = vsub.f32 %v705, %v706
    %v708 = vand.u32 %v707, 4294901760
    %709 = vmatmul.f32.gmra.mxu0 %v708
    %v710 = vpop.f32.mrf.mxu0
    %v711 = vadd.f32 0.0, %v710
    %712 = vdwg.mxu0
    %v713 = vand.u32 %v615, 4294901760
    %v714 = vsub.f32 %v615, %v713
    %v715 = vand.u32 %v714, 4294901760
    %v716 = vsub.f32 %v714, %v715
    %v717 = vand.u32 %v716, 4294901760
    %718 = vmatpush.msra.mxu0 %v717
    %v719 = vand.u32 %v614, 4294901760
    %v720 = vsub.f32 %v614, %v719
    %v721 = vand.u32 %v720, 4294901760
    %v722 = vsub.f32 %v720, %v721
    %v723 = vand.u32 %v722, 4294901760
    %724 = vmatpush.msra.mxu0 %v723
    %v725 = vand.u32 %v613, 4294901760
    %v726 = vsub.f32 %v613, %v725
    %v727 = vand.u32 %v726, 4294901760
    %v728 = vsub.f32 %v726, %v727
    %v729 = vand.u32 %v728, 4294901760
    %730 = vmatpush.msra.mxu0 %v729
    %v731 = vand.u32 %v612, 4294901760
    %v732 = vsub.f32 %v612, %v731
    %v733 = vand.u32 %v732, 4294901760
    %v734 = vsub.f32 %v732, %v733
    %v735 = vand.u32 %v734, 4294901760
    %736 = vmatpush.msra.mxu0 %v735
    %v737 = vand.u32 %v611, 4294901760
    %v738 = vsub.f32 %v611, %v737
    %v739 = vand.u32 %v738, 4294901760
    %v740 = vsub.f32 %v738, %v739
    %v741 = vand.u32 %v740, 4294901760
    %742 = vmatpush.msra.mxu0 %v741
    %v743 = vand.u32 %v610, 4294901760
    %v744 = vsub.f32 %v610, %v743
    %v745 = vand.u32 %v744, 4294901760
    %v746 = vsub.f32 %v744, %v745
    %v747 = vand.u32 %v746, 4294901760
    %748 = vmatpush.msra.mxu0 %v747
    %v749 = vand.u32 %v609, 4294901760
    %v750 = vsub.f32 %v609, %v749
    %v751 = vand.u32 %v750, 4294901760
    %v752 = vsub.f32 %v750, %v751
    %v753 = vand.u32 %v752, 4294901760
    %754 = vmatpush.msra.mxu0 %v753
    %v755 = vand.u32 %v608, 4294901760
    %v756 = vsub.f32 %v608, %v755
    %v757 = vand.u32 %v756, 4294901760
    %v758 = vsub.f32 %v756, %v757
    %v759 = vand.u32 %v758, 4294901760
    %760 = vmatpush.msra.mxu0 %v759
    %v761 = vand.u32 %v607, 4294901760
    %v762 = vsub.f32 %v607, %v761
    %v763 = vand.u32 %v762, 4294901760
    %v764 = vsub.f32 %v762, %v763
    %v765 = vand.u32 %v764, 4294901760
    %766 = vmatpush.msra.mxu0 %v765
    %v767 = vand.u32 %v606, 4294901760
    %v768 = vsub.f32 %v606, %v767
    %v769 = vand.u32 %v768, 4294901760
    %v770 = vsub.f32 %v768, %v769
    %v771 = vand.u32 %v770, 4294901760
    %772 = vmatpush.msra.mxu0 %v771
    %v773 = vand.u32 %v605, 4294901760
    %v774 = vsub.f32 %v605, %v773
    %v775 = vand.u32 %v774, 4294901760
    %v776 = vsub.f32 %v774, %v775
    %v777 = vand.u32 %v776, 4294901760
    %778 = vmatpush.msra.mxu0 %v777
    %v779 = vand.u32 %v604, 4294901760
    %v780 = vsub.f32 %v604, %v779
    %v781 = vand.u32 %v780, 4294901760
    %v782 = vsub.f32 %v780, %v781
    %v783 = vand.u32 %v782, 4294901760
    %784 = vmatpush.msra.mxu0 %v783
    %v785 = vand.u32 %v603, 4294901760
    %v786 = vsub.f32 %v603, %v785
    %v787 = vand.u32 %v786, 4294901760
    %v788 = vsub.f32 %v786, %v787
    %v789 = vand.u32 %v788, 4294901760
    %790 = vmatpush.msra.mxu0 %v789
    %v791 = vand.u32 %v602, 4294901760
    %v792 = vsub.f32 %v602, %v791
    %v793 = vand.u32 %v792, 4294901760
    %v794 = vsub.f32 %v792, %v793
    %v795 = vand.u32 %v794, 4294901760
    %796 = vmatpush.msra.mxu0 %v795
    %v797 = vand.u32 %v601, 4294901760
    %v798 = vsub.f32 %v601, %v797
    %v799 = vand.u32 %v798, 4294901760
    %v800 = vsub.f32 %v798, %v799
    %v801 = vand.u32 %v800, 4294901760
    %802 = vmatpush.msra.mxu0 %v801
    %v803 = vand.u32 %v600, 4294901760
    %v804 = vsub.f32 %v600, %v803
    %v805 = vand.u32 %v804, 4294901760
    %v806 = vsub.f32 %v804, %v805
    %v807 = vand.u32 %v806, 4294901760
    %808 = vmatpush.msra.mxu0 %v807
    %v809 = vand.u32 %v592, 4294901760
    %810 = vmatmul.f32.gmra.mxu0 %v809
    %v811 = vpop.f32.mrf.mxu0
    %v812 = vadd.f32 %v655, %v811
    %v813 = vand.u32 %v593, 4294901760
    %814 = vmatmul.f32.gmra.mxu0 %v813
    %v815 = vpop.f32.mrf.mxu0
    %v816 = vadd.f32 %v663, %v815
    %v817 = vand.u32 %v594, 4294901760
    %818 = vmatmul.f32.gmra.mxu0 %v817
    %v819 = vpop.f32.mrf.mxu0
    %v820 = vadd.f32 %v671, %v819
    %v821 = vand.u32 %v595, 4294901760
    %822 = vmatmul.f32.gmra.mxu0 %v821
    %v823 = vpop.f32.mrf.mxu0
    %v824 = vadd.f32 %v679, %v823
    %v825 = vand.u32 %v596, 4294901760
    %826 = vmatmul.f32.gmra.mxu0 %v825
    %v827 = vpop.f32.mrf.mxu0
    %v828 = vadd.f32 %v687, %v827
    %v829 = vand.u32 %v597, 4294901760
    %830 = vmatmul.f32.gmra.mxu0 %v829
    %v831 = vpop.f32.mrf.mxu0
    %v832 = vadd.f32 %v695, %v831
    %v833 = vand.u32 %v598, 4294901760
    %834 = vmatmul.f32.gmra.mxu0 %v833
    %v835 = vpop.f32.mrf.mxu0
    %v836 = vadd.f32 %v703, %v835
    %v837 = vand.u32 %v599, 4294901760
    %838 = vmatmul.f32.gmra.mxu0 %v837
    %v839 = vpop.f32.mrf.mxu0
    %v840 = vadd.f32 %v711, %v839
    %841 = vdwg.mxu0
    %v842 = vand.u32 %v615, 4294901760
    %v843 = vsub.f32 %v615, %v842
    %844 = vmatpush.msra.mxu0 %v843
    %v845 = vand.u32 %v614, 4294901760
    %v846 = vsub.f32 %v614, %v845
    %847 = vmatpush.msra.mxu0 %v846
    %v848 = vand.u32 %v613, 4294901760
    %v849 = vsub.f32 %v613, %v848
    %850 = vmatpush.msra.mxu0 %v849
    %v851 = vand.u32 %v612, 4294901760
    %v852 = vsub.f32 %v612, %v851
    %853 = vmatpush.msra.mxu0 %v852
    %v854 = vand.u32 %v611, 4294901760
    %v855 = vsub.f32 %v611, %v854
    %856 = vmatpush.msra.mxu0 %v855
    %v857 = vand.u32 %v610, 4294901760
    %v858 = vsub.f32 %v610, %v857
    %859 = vmatpush.msra.mxu0 %v858
    %v860 = vand.u32 %v609, 4294901760
    %v861 = vsub.f32 %v609, %v860
    %862 = vmatpush.msra.mxu0 %v861
    %v863 = vand.u32 %v608, 4294901760
    %v864 = vsub.f32 %v608, %v863
    %865 = vmatpush.msra.mxu0 %v864
    %v866 = vand.u32 %v607, 4294901760
    %v867 = vsub.f32 %v607, %v866
    %868 = vmatpush.msra.mxu0 %v867
    %v869 = vand.u32 %v606, 4294901760
    %v870 = vsub.f32 %v606, %v869
    %871 = vmatpush.msra.mxu0 %v870
    %v872 = vand.u32 %v605, 4294901760
    %v873 = vsub.f32 %v605, %v872
    %874 = vmatpush.msra.mxu0 %v873
    %v875 = vand.u32 %v604, 4294901760
    %v876 = vsub.f32 %v604, %v875
    %877 = vmatpush.msra.mxu0 %v876
    %v878 = vand.u32 %v603, 4294901760
    %v879 = vsub.f32 %v603, %v878
    %880 = vmatpush.msra.mxu0 %v879
    %v881 = vand.u32 %v602, 4294901760
    %v882 = vsub.f32 %v602, %v881
    %883 = vmatpush.msra.mxu0 %v882
    %v884 = vand.u32 %v601, 4294901760
    %v885 = vsub.f32 %v601, %v884
    %886 = vmatpush.msra.mxu0 %v885
    %v887 = vand.u32 %v600, 4294901760
    %v888 = vsub.f32 %v600, %v887
    %889 = vmatpush.msra.mxu0 %v888
    %v890 = vand.u32 %v592, 4294901760
    %v891 = vsub.f32 %v592, %v890
    %892 = vmatmul.f32.gmra.mxu0 %v891
    %v893 = vpop.f32.mrf.mxu0
    %v894 = vadd.f32 %v812, %v893
    %v895 = vand.u32 %v593, 4294901760
    %v896 = vsub.f32 %v593, %v895
    %897 = vmatmul.f32.gmra.mxu0 %v896
    %v898 = vpop.f32.mrf.mxu0
    %v899 = vadd.f32 %v816, %v898
    %v900 = vand.u32 %v594, 4294901760
    %v901 = vsub.f32 %v594, %v900
    %902 = vmatmul.f32.gmra.mxu0 %v901
    %v903 = vpop.f32.mrf.mxu0
    %v904 = vadd.f32 %v820, %v903
    %v905 = vand.u32 %v595, 4294901760
    %v906 = vsub.f32 %v595, %v905
    %907 = vmatmul.f32.gmra.mxu0 %v906
    %v908 = vpop.f32.mrf.mxu0
    %v909 = vadd.f32 %v824, %v908
    %v910 = vand.u32 %v596, 4294901760
    %v911 = vsub.f32 %v596, %v910
    %912 = vmatmul.f32.gmra.mxu0 %v911
    %v913 = vpop.f32.mrf.mxu0
    %v914 = vadd.f32 %v828, %v913
    %v915 = vand.u32 %v597, 4294901760
    %v916 = vsub.f32 %v597, %v915
    %917 = vmatmul.f32.gmra.mxu0 %v916
    %v918 = vpop.f32.mrf.mxu0
    %v919 = vadd.f32 %v832, %v918
    %v920 = vand.u32 %v598, 4294901760
    %v921 = vsub.f32 %v598, %v920
    %922 = vmatmul.f32.gmra.mxu0 %v921
    %v923 = vpop.f32.mrf.mxu0
    %v924 = vadd.f32 %v836, %v923
    %v925 = vand.u32 %v599, 4294901760
    %v926 = vsub.f32 %v599, %v925
    %927 = vmatmul.f32.gmra.mxu0 %v926
    %v928 = vpop.f32.mrf.mxu0
    %v929 = vadd.f32 %v840, %v928
    %930 = vdwg.mxu0
    %v931 = vand.u32 %v615, 4294901760
    %932 = vmatpush.msra.mxu0 %v931
    %v933 = vand.u32 %v614, 4294901760
    %934 = vmatpush.msra.mxu0 %v933
    %v935 = vand.u32 %v613, 4294901760
    %936 = vmatpush.msra.mxu0 %v935
    %v937 = vand.u32 %v612, 4294901760
    %938 = vmatpush.msra.mxu0 %v937
    %v939 = vand.u32 %v611, 4294901760
    %940 = vmatpush.msra.mxu0 %v939
    %v941 = vand.u32 %v610, 4294901760
    %942 = vmatpush.msra.mxu0 %v941
    %v943 = vand.u32 %v609, 4294901760
    %944 = vmatpush.msra.mxu0 %v943
    %v945 = vand.u32 %v608, 4294901760
    %946 = vmatpush.msra.mxu0 %v945
    %v947 = vand.u32 %v607, 4294901760
    %948 = vmatpush.msra.mxu0 %v947
    %v949 = vand.u32 %v606, 4294901760
    %950 = vmatpush.msra.mxu0 %v949
    %v951 = vand.u32 %v605, 4294901760
    %952 = vmatpush.msra.mxu0 %v951
    %v953 = vand.u32 %v604, 4294901760
    %954 = vmatpush.msra.mxu0 %v953
    %v955 = vand.u32 %v603, 4294901760
    %956 = vmatpush.msra.mxu0 %v955
    %v957 = vand.u32 %v602, 4294901760
    %958 = vmatpush.msra.mxu0 %v957
    %v959 = vand.u32 %v601, 4294901760
    %960 = vmatpush.msra.mxu0 %v959
    %v961 = vand.u32 %v600, 4294901760
    %962 = vmatpush.msra.mxu0 %v961
    %v963 = vand.u32 %v592, 4294901760
    %v964 = vsub.f32 %v592, %v963
    %v965 = vand.u32 %v964, 4294901760
    %966 = vmatmul.f32.gmra.mxu0 %v965
    %v967 = vpop.f32.mrf.mxu0
    %v968 = vadd.f32 %v894, %v967
    %v969 = vand.u32 %v593, 4294901760
    %v970 = vsub.f32 %v593, %v969
    %v971 = vand.u32 %v970, 4294901760
    %972 = vmatmul.f32.gmra.mxu0 %v971
    %v973 = vpop.f32.mrf.mxu0
    %v974 = vadd.f32 %v899, %v973
    %v975 = vand.u32 %v594, 4294901760
    %v976 = vsub.f32 %v594, %v975
    %v977 = vand.u32 %v976, 4294901760
    %978 = vmatmul.f32.gmra.mxu0 %v977
    %v979 = vpop.f32.mrf.mxu0
    %v980 = vadd.f32 %v904, %v979
    %v981 = vand.u32 %v595, 4294901760
    %v982 = vsub.f32 %v595, %v981
    %v983 = vand.u32 %v982, 4294901760
    %984 = vmatmul.f32.gmra.mxu0 %v983
    %v985 = vpop.f32.mrf.mxu0
    %v986 = vadd.f32 %v909, %v985
    %v987 = vand.u32 %v596, 4294901760
    %v988 = vsub.f32 %v596, %v987
    %v989 = vand.u32 %v988, 4294901760
    %990 = vmatmul.f32.gmra.mxu0 %v989
    %v991 = vpop.f32.mrf.mxu0
    %v992 = vadd.f32 %v914, %v991
    %v993 = vand.u32 %v597, 4294901760
    %v994 = vsub.f32 %v597, %v993
    %v995 = vand.u32 %v994, 4294901760
    %996 = vmatmul.f32.gmra.mxu0 %v995
    %v997 = vpop.f32.mrf.mxu0
    %v998 = vadd.f32 %v919, %v997
    %v999 = vand.u32 %v598, 4294901760
    %v1000 = vsub.f32 %v598, %v999
    %v1001 = vand.u32 %v1000, 4294901760
    %1002 = vmatmul.f32.gmra.mxu0 %v1001
    %v1003 = vpop.f32.mrf.mxu0
    %v1004 = vadd.f32 %v924, %v1003
    %v1005 = vand.u32 %v599, 4294901760
    %v1006 = vsub.f32 %v599, %v1005
    %v1007 = vand.u32 %v1006, 4294901760
    %1008 = vmatmul.f32.gmra.mxu0 %v1007
    %v1009 = vpop.f32.mrf.mxu0
    %v1010 = vadd.f32 %v929, %v1009
    %1011 = vdwg.mxu0
    %v1012 = vand.u32 %v615, 4294901760
    %v1013 = vsub.f32 %v615, %v1012
    %v1014 = vand.u32 %v1013, 4294901760
    %1015 = vmatpush.msra.mxu0 %v1014
    %v1016 = vand.u32 %v614, 4294901760
    %v1017 = vsub.f32 %v614, %v1016
    %v1018 = vand.u32 %v1017, 4294901760
    %1019 = vmatpush.msra.mxu0 %v1018
    %v1020 = vand.u32 %v613, 4294901760
    %v1021 = vsub.f32 %v613, %v1020
    %v1022 = vand.u32 %v1021, 4294901760
    %1023 = vmatpush.msra.mxu0 %v1022
    %v1024 = vand.u32 %v612, 4294901760
    %v1025 = vsub.f32 %v612, %v1024
    %v1026 = vand.u32 %v1025, 4294901760
    %1027 = vmatpush.msra.mxu0 %v1026
    %v1028 = vand.u32 %v611, 4294901760
    %v1029 = vsub.f32 %v611, %v1028
    %v1030 = vand.u32 %v1029, 4294901760
    %1031 = vmatpush.msra.mxu0 %v1030
    %v1032 = vand.u32 %v610, 4294901760
    %v1033 = vsub.f32 %v610, %v1032
    %v1034 = vand.u32 %v1033, 4294901760
    %1035 = vmatpush.msra.mxu0 %v1034
    %v1036 = vand.u32 %v609, 4294901760
    %v1037 = vsub.f32 %v609, %v1036
    %v1038 = vand.u32 %v1037, 4294901760
    %1039 = vmatpush.msra.mxu0 %v1038
    %v1040 = vand.u32 %v608, 4294901760
    %v1041 = vsub.f32 %v608, %v1040
    %v1042 = vand.u32 %v1041, 4294901760
    %1043 = vmatpush.msra.mxu0 %v1042
    %v1044 = vand.u32 %v607, 4294901760
    %v1045 = vsub.f32 %v607, %v1044
    %v1046 = vand.u32 %v1045, 4294901760
    %1047 = vmatpush.msra.mxu0 %v1046
    %v1048 = vand.u32 %v606, 4294901760
    %v1049 = vsub.f32 %v606, %v1048
    %v1050 = vand.u32 %v1049, 4294901760
    %1051 = vmatpush.msra.mxu0 %v1050
    %v1052 = vand.u32 %v605, 4294901760
    %v1053 = vsub.f32 %v605, %v1052
    %v1054 = vand.u32 %v1053, 4294901760
    %1055 = vmatpush.msra.mxu0 %v1054
    %v1056 = vand.u32 %v604, 4294901760
    %v1057 = vsub.f32 %v604, %v1056
    %v1058 = vand.u32 %v1057, 4294901760
    %1059 = vmatpush.msra.mxu0 %v1058
    %v1060 = vand.u32 %v603, 4294901760
    %v1061 = vsub.f32 %v603, %v1060
    %v1062 = vand.u32 %v1061, 4294901760
    %1063 = vmatpush.msra.mxu0 %v1062
    %v1064 = vand.u32 %v602, 4294901760
    %v1065 = vsub.f32 %v602, %v1064
    %v1066 = vand.u32 %v1065, 4294901760
    %1067 = vmatpush.msra.mxu0 %v1066
    %v1068 = vand.u32 %v601, 4294901760
    %v1069 = vsub.f32 %v601, %v1068
    %v1070 = vand.u32 %v1069, 4294901760
    %1071 = vmatpush.msra.mxu0 %v1070
    %v1072 = vand.u32 %v600, 4294901760
    %v1073 = vsub.f32 %v600, %v1072
    %v1074 = vand.u32 %v1073, 4294901760
    %1075 = vmatpush.msra.mxu0 %v1074
    %v1076 = vand.u32 %v592, 4294901760
    %1077 = vmatmul.f32.gmra.mxu0 %v1076
    %v1078 = vpop.f32.mrf.mxu0
    %v1079 = vadd.f32 %v968, %v1078
    %v1080 = vand.u32 %v593, 4294901760
    %1081 = vmatmul.f32.gmra.mxu0 %v1080
    %v1082 = vpop.f32.mrf.mxu0
    %v1083 = vadd.f32 %v974, %v1082
    %v1084 = vand.u32 %v594, 4294901760
    %1085 = vmatmul.f32.gmra.mxu0 %v1084
    %v1086 = vpop.f32.mrf.mxu0
    %v1087 = vadd.f32 %v980, %v1086
    %v1088 = vand.u32 %v595, 4294901760
    %1089 = vmatmul.f32.gmra.mxu0 %v1088
    %v1090 = vpop.f32.mrf.mxu0
    %v1091 = vadd.f32 %v986, %v1090
    %v1092 = vand.u32 %v596, 4294901760
    %1093 = vmatmul.f32.gmra.mxu0 %v1092
    %v1094 = vpop.f32.mrf.mxu0
    %v1095 = vadd.f32 %v992, %v1094
    %v1096 = vand.u32 %v597, 4294901760
    %1097 = vmatmul.f32.gmra.mxu0 %v1096
    %v1098 = vpop.f32.mrf.mxu0
    %v1099 = vadd.f32 %v998, %v1098
    %v1100 = vand.u32 %v598, 4294901760
    %1101 = vmatmul.f32.gmra.mxu0 %v1100
    %v1102 = vpop.f32.mrf.mxu0
    %v1103 = vadd.f32 %v1004, %v1102
    %v1104 = vand.u32 %v599, 4294901760
    %1105 = vmatmul.f32.gmra.mxu0 %v1104
    %v1106 = vpop.f32.mrf.mxu0
    %v1107 = vadd.f32 %v1010, %v1106
    %1108 = vdwg.mxu0
    %v1109 = vand.u32 %v615, 4294901760
    %1110 = vmatpush.msra.mxu0 %v1109
    %v1111 = vand.u32 %v614, 4294901760
    %1112 = vmatpush.msra.mxu0 %v1111
    %v1113 = vand.u32 %v613, 4294901760
    %1114 = vmatpush.msra.mxu0 %v1113
    %v1115 = vand.u32 %v612, 4294901760
    %1116 = vmatpush.msra.mxu0 %v1115
    %v1117 = vand.u32 %v611, 4294901760
    %1118 = vmatpush.msra.mxu0 %v1117
    %v1119 = vand.u32 %v610, 4294901760
    %1120 = vmatpush.msra.mxu0 %v1119
    %v1121 = vand.u32 %v609, 4294901760
    %1122 = vmatpush.msra.mxu0 %v1121
    %v1123 = vand.u32 %v608, 4294901760
    %1124 = vmatpush.msra.mxu0 %v1123
    %v1125 = vand.u32 %v607, 4294901760
    %1126 = vmatpush.msra.mxu0 %v1125
    %v1127 = vand.u32 %v606, 4294901760
    %1128 = vmatpush.msra.mxu0 %v1127
    %v1129 = vand.u32 %v605, 4294901760
    %1130 = vmatpush.msra.mxu0 %v1129
    %v1131 = vand.u32 %v604, 4294901760
    %1132 = vmatpush.msra.mxu0 %v1131
    %v1133 = vand.u32 %v603, 4294901760
    %1134 = vmatpush.msra.mxu0 %v1133
    %v1135 = vand.u32 %v602, 4294901760
    %1136 = vmatpush.msra.mxu0 %v1135
    %v1137 = vand.u32 %v601, 4294901760
    %1138 = vmatpush.msra.mxu0 %v1137
    %v1139 = vand.u32 %v600, 4294901760
    %1140 = vmatpush.msra.mxu0 %v1139
    %v1141 = vand.u32 %v592, 4294901760
    %1142 = vmatmul.f32.gmra.mxu0 %v1141
    %v1143 = vpop.f32.mrf.mxu0
    %v1144 = vadd.f32 %v1079, %v1143
    %v1145 = vand.u32 %v593, 4294901760
    %1146 = vmatmul.f32.gmra.mxu0 %v1145
    %v1147 = vpop.f32.mrf.mxu0
    %v1148 = vadd.f32 %v1083, %v1147
    %v1149 = vand.u32 %v594, 4294901760
    %1150 = vmatmul.f32.gmra.mxu0 %v1149
    %v1151 = vpop.f32.mrf.mxu0
    %v1152 = vadd.f32 %v1087, %v1151
    %v1153 = vand.u32 %v595, 4294901760
    %1154 = vmatmul.f32.gmra.mxu0 %v1153
    %v1155 = vpop.f32.mrf.mxu0
    %v1156 = vadd.f32 %v1091, %v1155
    %v1157 = vand.u32 %v596, 4294901760
    %1158 = vmatmul.f32.gmra.mxu0 %v1157
    %v1159 = vpop.f32.mrf.mxu0
    %v1160 = vadd.f32 %v1095, %v1159
    %v1161 = vand.u32 %v597, 4294901760
    %1162 = vmatmul.f32.gmra.mxu0 %v1161
    %v1163 = vpop.f32.mrf.mxu0
    %v1164 = vadd.f32 %v1099, %v1163
    %v1165 = vand.u32 %v598, 4294901760
    %1166 = vmatmul.f32.gmra.mxu0 %v1165
    %v1167 = vpop.f32.mrf.mxu0
    %v1168 = vadd.f32 %v1103, %v1167
    %v1169 = vand.u32 %v599, 4294901760
    %1170 = vmatmul.f32.gmra.mxu0 %v1169
    %v1171 = vpop.f32.mrf.mxu0
    %v1172 = vadd.f32 %v1107, %v1171
    %1173 = vdwg.mxu0
    %1174 = vst [vmem:[#allocation3] sm:$0xff] %v1144
    %1175 = vst [vmem:[#allocation3 + $0x8] sm:$0xff] %v1148
    %1176 = vst [vmem:[#allocation3 + $0x10] sm:$0xff] %v1152
    %1177 = vst [vmem:[#allocation3 + $0x18] sm:$0xff] %v1156
    %1178 = vst [vmem:[#allocation3 + $0x20] sm:$0xff] %v1160
    %1179 = vst [vmem:[#allocation3 + $0x28] sm:$0xff] %v1164
    %1180 = vst [vmem:[#allocation3 + $0x30] sm:$0xff] %v1168
    %1181 = vst [vmem:[#allocation3 + $0x38] sm:$0xff] %v1172
    %v1182 = vmul.f32 %v512, 0.0
    %v1183 = vld [vmem:[#allocation3] sm:$0xff]
    %v1184 = vadd.f32 %v1182, %v1183
    %v1185 = vsub.f32 %v1184, 0.6
    %vm1186 = vcmp.gt.f32.partialorder %v1185, 0.0
    %v1187 = vsel %vm1186, 1, 0
    %v1188 = vcvt.s32.f32 %v1187
    %1189 = vst [vmem:[#allocation3] sm:$0xff] %v1188
    %v1190 = vsel %vm1186, 0.0, %v1184
    %v1191 = vmul.f32 %v1190, %v512
    %s1192 = scalar_lea.vmem [#allocation3], 8
    %v1193 = vld [vmem:[%s1192] sm:$0xff]
    %v1194 = vadd.f32 %v1191, %v1193
    %v1195 = vsub.f32 %v1194, 0.6
    %vm1196 = vcmp.gt.f32.partialorder %v1195, 0.0
    %v1197 = vsel %vm1196, 1, 0
    %v1198 = vcvt.s32.f32 %v1197
    %1199 = vst [vmem:[%s1192] sm:$0xff] %v1198
    %v1200 = vsel %vm1196, 0.0, %v1194
    %v1201 = vmul.f32 %v1200, %v512
    %s1202 = scalar_lea.vmem [#allocation3], 16
    %v1203 = vld [vmem:[%s1202] sm:$0xff]
    %v1204 = vadd.f32 %v1201, %v1203
    %v1205 = vsub.f32 %v1204, 0.6
    %vm1206 = vcmp.gt.f32.partialorder %v1205, 0.0
    %v1207 = vsel %vm1206, 1, 0
    %v1208 = vcvt.s32.f32 %v1207
    %1209 = vst [vmem:[%s1202] sm:$0xff] %v1208
    %v1210 = vsel %vm1206, 0.0, %v1204
    %v1211 = vmul.f32 %v1210, %v512
    %s1212 = scalar_lea.vmem [#allocation3], 24
    %v1213 = vld [vmem:[%s1212] sm:$0xff]
    %v1214 = vadd.f32 %v1211, %v1213
    %v1215 = vsub.f32 %v1214, 0.6
    %vm1216 = vcmp.gt.f32.partialorder %v1215, 0.0
    %v1217 = vsel %vm1216, 1, 0
    %v1218 = vcvt.s32.f32 %v1217
    %1219 = vst [vmem:[%s1212] sm:$0xff] %v1218
    %v1220 = vsel %vm1216, 0.0, %v1214
    %v1221 = vmul.f32 %v1220, %v512
    %s1222 = scalar_lea.vmem [#allocation3], 32
    %v1223 = vld [vmem:[%s1222] sm:$0xff]
    %v1224 = vadd.f32 %v1221, %v1223
    %v1225 = vsub.f32 %v1224, 0.6
    %vm1226 = vcmp.gt.f32.partialorder %v1225, 0.0
    %v1227 = vsel %vm1226, 1, 0
    %v1228 = vcvt.s32.f32 %v1227
    %1229 = vst [vmem:[%s1222] sm:$0xff] %v1228
    %v1230 = vsel %vm1226, 0.0, %v1224
    %v1231 = vmul.f32 %v1230, %v512
    %s1232 = scalar_lea.vmem [#allocation3], 40
    %v1233 = vld [vmem:[%s1232] sm:$0xff]
    %v1234 = vadd.f32 %v1231, %v1233
    %v1235 = vsub.f32 %v1234, 0.6
    %vm1236 = vcmp.gt.f32.partialorder %v1235, 0.0
    %v1237 = vsel %vm1236, 1, 0
    %v1238 = vcvt.s32.f32 %v1237
    %1239 = vst [vmem:[%s1232] sm:$0xff] %v1238
    %v1240 = vsel %vm1236, 0.0, %v1234
    %v1241 = vmul.f32 %v1240, %v512
    %s1242 = scalar_lea.vmem [#allocation3], 48
    %v1243 = vld [vmem:[%s1242] sm:$0xff]
    %v1244 = vadd.f32 %v1241, %v1243
    %v1245 = vsub.f32 %v1244, 0.6
    %vm1246 = vcmp.gt.f32.partialorder %v1245, 0.0
    %v1247 = vsel %vm1246, 1, 0
    %v1248 = vcvt.s32.f32 %v1247
    %1249 = vst [vmem:[%s1242] sm:$0xff] %v1248
    %v1250 = vsel %vm1246, 0.0, %v1244
    %v1251 = vmul.f32 %v1250, %v512
    %s1252 = scalar_lea.vmem [#allocation3], 56
    %v1253 = vld [vmem:[%s1252] sm:$0xff]
    %v1254 = vadd.f32 %v1251, %v1253
    %v1255 = vsub.f32 %v1254, 0.6
    %vm1256 = vcmp.gt.f32.partialorder %v1255, 0.0
    %v1257 = vsel %vm1256, 1, 0
    %v1258 = vcvt.s32.f32 %v1257
    %1259 = vst [vmem:[%s1252] sm:$0xff] %v1258
    %v1260 = vld [vmem:[#allocation3] sm:$0xff]
    %v1261 = vld [vmem:[#allocation3 + $0x8] sm:$0xff]
    %v1262 = vld [vmem:[#allocation3 + $0x10] sm:$0xff]
    %v1263 = vld [vmem:[#allocation3 + $0x18] sm:$0xff]
    %v1264 = vld [vmem:[#allocation3 + $0x20] sm:$0xff]
    %v1265 = vld [vmem:[#allocation3 + $0x28] sm:$0xff]
    %v1266 = vld [vmem:[#allocation3 + $0x30] sm:$0xff]
    %v1267 = vld [vmem:[#allocation3 + $0x38] sm:$0xff]
    %v1268 = vld [vmem:[#allocation7] sm:$0xff]
    %v1269 = vld [vmem:[#allocation7 + $0x8] sm:$0xff]
    %v1270 = vld [vmem:[#allocation7 + $0x10] sm:$0xff]
    %v1271 = vld [vmem:[#allocation7 + $0x18] sm:$0xff]
    %v1272 = vld [vmem:[#allocation7 + $0x20] sm:$0xff]
    %v1273 = vld [vmem:[#allocation7 + $0x28] sm:$0xff]
    %v1274 = vld [vmem:[#allocation7 + $0x30] sm:$0xff]
    %v1275 = vld [vmem:[#allocation7 + $0x38] sm:$0xff]
    %v1276 = vld [vmem:[#allocation7 + $0x40] sm:$0xff]
    %v1277 = vld [vmem:[#allocation7 + $0x48] sm:$0xff]
    %v1278 = vld [vmem:[#allocation7 + $0x50] sm:$0xff]
    %v1279 = vld [vmem:[#allocation7 + $0x58] sm:$0xff]
    %v1280 = vld [vmem:[#allocation7 + $0x60] sm:$0xff]
    %v1281 = vld [vmem:[#allocation7 + $0x68] sm:$0xff]
    %v1282 = vld [vmem:[#allocation7 + $0x70] sm:$0xff]
    %v1283 = vld [vmem:[#allocation7 + $0x78] sm:$0xff]
    %v1284 = vld [vmem:[%s6] sm:$0x1]
    %v1286 = vperm.slane %v1284, 0
    %v1288 = vand.u32 %v1283, 4294901760
    %1289 = vmatpush.msra.mxu0 %v1288
    %v1290 = vand.u32 %v1282, 4294901760
    %1291 = vmatpush.msra.mxu0 %v1290
    %v1292 = vand.u32 %v1281, 4294901760
    %1293 = vmatpush.msra.mxu0 %v1292
    %v1294 = vand.u32 %v1280, 4294901760
    %1295 = vmatpush.msra.mxu0 %v1294
    %v1296 = vand.u32 %v1279, 4294901760
    %1297 = vmatpush.msra.mxu0 %v1296
    %v1298 = vand.u32 %v1278, 4294901760
    %1299 = vmatpush.msra.mxu0 %v1298
    %v1300 = vand.u32 %v1277, 4294901760
    %1301 = vmatpush.msra.mxu0 %v1300
    %v1302 = vand.u32 %v1276, 4294901760
    %1303 = vmatpush.msra.mxu0 %v1302
    %v1304 = vand.u32 %v1275, 4294901760
    %1305 = vmatpush.msra.mxu0 %v1304
    %v1306 = vand.u32 %v1274, 4294901760
    %1307 = vmatpush.msra.mxu0 %v1306
    %v1308 = vand.u32 %v1273, 4294901760
    %1309 = vmatpush.msra.mxu0 %v1308
    %v1310 = vand.u32 %v1272, 4294901760
    %1311 = vmatpush.msra.mxu0 %v1310
    %v1312 = vand.u32 %v1271, 4294901760
    %1313 = vmatpush.msra.mxu0 %v1312
    %v1314 = vand.u32 %v1270, 4294901760
    %1315 = vmatpush.msra.mxu0 %v1314
    %v1316 = vand.u32 %v1269, 4294901760
    %1317 = vmatpush.msra.mxu0 %v1316
    %v1318 = vand.u32 %v1268, 4294901760
    %1319 = vmatpush.msra.mxu0 %v1318
    %v1320 = vand.u32 %v1260, 4294901760
    %v1321 = vsub.f32 %v1260, %v1320
    %v1322 = vand.u32 %v1321, 4294901760
    %v1323 = vsub.f32 %v1321, %v1322
    %v1324 = vand.u32 %v1323, 4294901760
    %1325 = vmatmul.f32.gmra.mxu0 %v1324
    %v1326 = vpop.f32.mrf.mxu0
    %v1327 = vadd.f32 %v1286, %v1326
    %v1328 = vand.u32 %v1261, 4294901760
    %v1329 = vsub.f32 %v1261, %v1328
    %v1330 = vand.u32 %v1329, 4294901760
    %v1331 = vsub.f32 %v1329, %v1330
    %v1332 = vand.u32 %v1331, 4294901760
    %1333 = vmatmul.f32.gmra.mxu0 %v1332
    %v1334 = vpop.f32.mrf.mxu0
    %v1335 = vadd.f32 %v1286, %v1334
    %v1336 = vand.u32 %v1262, 4294901760
    %v1337 = vsub.f32 %v1262, %v1336
    %v1338 = vand.u32 %v1337, 4294901760
    %v1339 = vsub.f32 %v1337, %v1338
    %v1340 = vand.u32 %v1339, 4294901760
    %1341 = vmatmul.f32.gmra.mxu0 %v1340
    %v1342 = vpop.f32.mrf.mxu0
    %v1343 = vadd.f32 %v1286, %v1342
    %v1344 = vand.u32 %v1263, 4294901760
    %v1345 = vsub.f32 %v1263, %v1344
    %v1346 = vand.u32 %v1345, 4294901760
    %v1347 = vsub.f32 %v1345, %v1346
    %v1348 = vand.u32 %v1347, 4294901760
    %1349 = vmatmul.f32.gmra.mxu0 %v1348
    %v1350 = vpop.f32.mrf.mxu0
    %v1351 = vadd.f32 %v1286, %v1350
    %v1352 = vand.u32 %v1264, 4294901760
    %v1353 = vsub.f32 %v1264, %v1352
    %v1354 = vand.u32 %v1353, 4294901760
    %v1355 = vsub.f32 %v1353, %v1354
    %v1356 = vand.u32 %v1355, 4294901760
    %1357 = vmatmul.f32.gmra.mxu0 %v1356
    %v1358 = vpop.f32.mrf.mxu0
    %v1359 = vadd.f32 %v1286, %v1358
    %v1360 = vand.u32 %v1265, 4294901760
    %v1361 = vsub.f32 %v1265, %v1360
    %v1362 = vand.u32 %v1361, 4294901760
    %v1363 = vsub.f32 %v1361, %v1362
    %v1364 = vand.u32 %v1363, 4294901760
    %1365 = vmatmul.f32.gmra.mxu0 %v1364
    %v1366 = vpop.f32.mrf.mxu0
    %v1367 = vadd.f32 %v1286, %v1366
    %v1368 = vand.u32 %v1266, 4294901760
    %v1369 = vsub.f32 %v1266, %v1368
    %v1370 = vand.u32 %v1369, 4294901760
    %v1371 = vsub.f32 %v1369, %v1370
    %v1372 = vand.u32 %v1371, 4294901760
    %1373 = vmatmul.f32.gmra.mxu0 %v1372
    %v1374 = vpop.f32.mrf.mxu0
    %v1375 = vadd.f32 %v1286, %v1374
    %v1376 = vand.u32 %v1267, 4294901760
    %v1377 = vsub.f32 %v1267, %v1376
    %v1378 = vand.u32 %v1377, 4294901760
    %v1379 = vsub.f32 %v1377, %v1378
    %v1380 = vand.u32 %v1379, 4294901760
    %1381 = vmatmul.f32.gmra.mxu0 %v1380
    %v1382 = vpop.f32.mrf.mxu0
    %v1383 = vadd.f32 %v1286, %v1382
    %1384 = vdwg.mxu0
    %v1385 = vand.u32 %v1283, 4294901760
    %v1386 = vsub.f32 %v1283, %v1385
    %v1387 = vand.u32 %v1386, 4294901760
    %v1388 = vsub.f32 %v1386, %v1387
    %v1389 = vand.u32 %v1388, 4294901760
    %1390 = vmatpush.msra.mxu0 %v1389
    %v1391 = vand.u32 %v1282, 4294901760
    %v1392 = vsub.f32 %v1282, %v1391
    %v1393 = vand.u32 %v1392, 4294901760
    %v1394 = vsub.f32 %v1392, %v1393
    %v1395 = vand.u32 %v1394, 4294901760
    %1396 = vmatpush.msra.mxu0 %v1395
    %v1397 = vand.u32 %v1281, 4294901760
    %v1398 = vsub.f32 %v1281, %v1397
    %v1399 = vand.u32 %v1398, 4294901760
    %v1400 = vsub.f32 %v1398, %v1399
    %v1401 = vand.u32 %v1400, 4294901760
    %1402 = vmatpush.msra.mxu0 %v1401
    %v1403 = vand.u32 %v1280, 4294901760
    %v1404 = vsub.f32 %v1280, %v1403
    %v1405 = vand.u32 %v1404, 4294901760
    %v1406 = vsub.f32 %v1404, %v1405
    %v1407 = vand.u32 %v1406, 4294901760
    %1408 = vmatpush.msra.mxu0 %v1407
    %v1409 = vand.u32 %v1279, 4294901760
    %v1410 = vsub.f32 %v1279, %v1409
    %v1411 = vand.u32 %v1410, 4294901760
    %v1412 = vsub.f32 %v1410, %v1411
    %v1413 = vand.u32 %v1412, 4294901760
    %1414 = vmatpush.msra.mxu0 %v1413
    %v1415 = vand.u32 %v1278, 4294901760
    %v1416 = vsub.f32 %v1278, %v1415
    %v1417 = vand.u32 %v1416, 4294901760
    %v1418 = vsub.f32 %v1416, %v1417
    %v1419 = vand.u32 %v1418, 4294901760
    %1420 = vmatpush.msra.mxu0 %v1419
    %v1421 = vand.u32 %v1277, 4294901760
    %v1422 = vsub.f32 %v1277, %v1421
    %v1423 = vand.u32 %v1422, 4294901760
    %v1424 = vsub.f32 %v1422, %v1423
    %v1425 = vand.u32 %v1424, 4294901760
    %1426 = vmatpush.msra.mxu0 %v1425
    %v1427 = vand.u32 %v1276, 4294901760
    %v1428 = vsub.f32 %v1276, %v1427
    %v1429 = vand.u32 %v1428, 4294901760
    %v1430 = vsub.f32 %v1428, %v1429
    %v1431 = vand.u32 %v1430, 4294901760
    %1432 = vmatpush.msra.mxu0 %v1431
    %v1433 = vand.u32 %v1275, 4294901760
    %v1434 = vsub.f32 %v1275, %v1433
    %v1435 = vand.u32 %v1434, 4294901760
    %v1436 = vsub.f32 %v1434, %v1435
    %v1437 = vand.u32 %v1436, 4294901760
    %1438 = vmatpush.msra.mxu0 %v1437
    %v1439 = vand.u32 %v1274, 4294901760
    %v1440 = vsub.f32 %v1274, %v1439
    %v1441 = vand.u32 %v1440, 4294901760
    %v1442 = vsub.f32 %v1440, %v1441
    %v1443 = vand.u32 %v1442, 4294901760
    %1444 = vmatpush.msra.mxu0 %v1443
    %v1445 = vand.u32 %v1273, 4294901760
    %v1446 = vsub.f32 %v1273, %v1445
    %v1447 = vand.u32 %v1446, 4294901760
    %v1448 = vsub.f32 %v1446, %v1447
    %v1449 = vand.u32 %v1448, 4294901760
    %1450 = vmatpush.msra.mxu0 %v1449
    %v1451 = vand.u32 %v1272, 4294901760
    %v1452 = vsub.f32 %v1272, %v1451
    %v1453 = vand.u32 %v1452, 4294901760
    %v1454 = vsub.f32 %v1452, %v1453
    %v1455 = vand.u32 %v1454, 4294901760
    %1456 = vmatpush.msra.mxu0 %v1455
    %v1457 = vand.u32 %v1271, 4294901760
    %v1458 = vsub.f32 %v1271, %v1457
    %v1459 = vand.u32 %v1458, 4294901760
    %v1460 = vsub.f32 %v1458, %v1459
    %v1461 = vand.u32 %v1460, 4294901760
    %1462 = vmatpush.msra.mxu0 %v1461
    %v1463 = vand.u32 %v1270, 4294901760
    %v1464 = vsub.f32 %v1270, %v1463
    %v1465 = vand.u32 %v1464, 4294901760
    %v1466 = vsub.f32 %v1464, %v1465
    %v1467 = vand.u32 %v1466, 4294901760
    %1468 = vmatpush.msra.mxu0 %v1467
    %v1469 = vand.u32 %v1269, 4294901760
    %v1470 = vsub.f32 %v1269, %v1469
    %v1471 = vand.u32 %v1470, 4294901760
    %v1472 = vsub.f32 %v1470, %v1471
    %v1473 = vand.u32 %v1472, 4294901760
    %1474 = vmatpush.msra.mxu0 %v1473
    %v1475 = vand.u32 %v1268, 4294901760
    %v1476 = vsub.f32 %v1268, %v1475
    %v1477 = vand.u32 %v1476, 4294901760
    %v1478 = vsub.f32 %v1476, %v1477
    %v1479 = vand.u32 %v1478, 4294901760
    %1480 = vmatpush.msra.mxu0 %v1479
    %v1481 = vand.u32 %v1260, 4294901760
    %1482 = vmatmul.f32.gmra.mxu0 %v1481
    %v1483 = vpop.f32.mrf.mxu0
    %v1484 = vadd.f32 %v1327, %v1483
    %v1485 = vand.u32 %v1261, 4294901760
    %1486 = vmatmul.f32.gmra.mxu0 %v1485
    %v1487 = vpop.f32.mrf.mxu0
    %v1488 = vadd.f32 %v1335, %v1487
    %v1489 = vand.u32 %v1262, 4294901760
    %1490 = vmatmul.f32.gmra.mxu0 %v1489
    %v1491 = vpop.f32.mrf.mxu0
    %v1492 = vadd.f32 %v1343, %v1491
    %v1493 = vand.u32 %v1263, 4294901760
    %1494 = vmatmul.f32.gmra.mxu0 %v1493
    %v1495 = vpop.f32.mrf.mxu0
    %v1496 = vadd.f32 %v1351, %v1495
    %v1497 = vand.u32 %v1264, 4294901760
    %1498 = vmatmul.f32.gmra.mxu0 %v1497
    %v1499 = vpop.f32.mrf.mxu0
    %v1500 = vadd.f32 %v1359, %v1499
    %v1501 = vand.u32 %v1265, 4294901760
    %1502 = vmatmul.f32.gmra.mxu0 %v1501
    %v1503 = vpop.f32.mrf.mxu0
    %v1504 = vadd.f32 %v1367, %v1503
    %v1505 = vand.u32 %v1266, 4294901760
    %1506 = vmatmul.f32.gmra.mxu0 %v1505
    %v1507 = vpop.f32.mrf.mxu0
    %v1508 = vadd.f32 %v1375, %v1507
    %v1509 = vand.u32 %v1267, 4294901760
    %1510 = vmatmul.f32.gmra.mxu0 %v1509
    %v1511 = vpop.f32.mrf.mxu0
    %v1512 = vadd.f32 %v1383, %v1511
    %1513 = vdwg.mxu0
    %v1514 = vand.u32 %v1283, 4294901760
    %v1515 = vsub.f32 %v1283, %v1514
    %1516 = vmatpush.msra.mxu0 %v1515
    %v1517 = vand.u32 %v1282, 4294901760
    %v1518 = vsub.f32 %v1282, %v1517
    %1519 = vmatpush.msra.mxu0 %v1518
    %v1520 = vand.u32 %v1281, 4294901760
    %v1521 = vsub.f32 %v1281, %v1520
    %1522 = vmatpush.msra.mxu0 %v1521
    %v1523 = vand.u32 %v1280, 4294901760
    %v1524 = vsub.f32 %v1280, %v1523
    %1525 = vmatpush.msra.mxu0 %v1524
    %v1526 = vand.u32 %v1279, 4294901760
    %v1527 = vsub.f32 %v1279, %v1526
    %1528 = vmatpush.msra.mxu0 %v1527
    %v1529 = vand.u32 %v1278, 4294901760
    %v1530 = vsub.f32 %v1278, %v1529
    %1531 = vmatpush.msra.mxu0 %v1530
    %v1532 = vand.u32 %v1277, 4294901760
    %v1533 = vsub.f32 %v1277, %v1532
    %1534 = vmatpush.msra.mxu0 %v1533
    %v1535 = vand.u32 %v1276, 4294901760
    %v1536 = vsub.f32 %v1276, %v1535
    %1537 = vmatpush.msra.mxu0 %v1536
    %v1538 = vand.u32 %v1275, 4294901760
    %v1539 = vsub.f32 %v1275, %v1538
    %1540 = vmatpush.msra.mxu0 %v1539
    %v1541 = vand.u32 %v1274, 4294901760
    %v1542 = vsub.f32 %v1274, %v1541
    %1543 = vmatpush.msra.mxu0 %v1542
    %v1544 = vand.u32 %v1273, 4294901760
    %v1545 = vsub.f32 %v1273, %v1544
    %1546 = vmatpush.msra.mxu0 %v1545
    %v1547 = vand.u32 %v1272, 4294901760
    %v1548 = vsub.f32 %v1272, %v1547
    %1549 = vmatpush.msra.mxu0 %v1548
    %v1550 = vand.u32 %v1271, 4294901760
    %v1551 = vsub.f32 %v1271, %v1550
    %1552 = vmatpush.msra.mxu0 %v1551
    %v1553 = vand.u32 %v1270, 4294901760
    %v1554 = vsub.f32 %v1270, %v1553
    %1555 = vmatpush.msra.mxu0 %v1554
    %v1556 = vand.u32 %v1269, 4294901760
    %v1557 = vsub.f32 %v1269, %v1556
    %1558 = vmatpush.msra.mxu0 %v1557
    %v1559 = vand.u32 %v1268, 4294901760
    %v1560 = vsub.f32 %v1268, %v1559
    %1561 = vmatpush.msra.mxu0 %v1560
    %v1562 = vand.u32 %v1260, 4294901760
    %v1563 = vsub.f32 %v1260, %v1562
    %1564 = vmatmul.f32.gmra.mxu0 %v1563
    %v1565 = vpop.f32.mrf.mxu0
    %v1566 = vadd.f32 %v1484, %v1565
    %v1567 = vand.u32 %v1261, 4294901760
    %v1568 = vsub.f32 %v1261, %v1567
    %1569 = vmatmul.f32.gmra.mxu0 %v1568
    %v1570 = vpop.f32.mrf.mxu0
    %v1571 = vadd.f32 %v1488, %v1570
    %v1572 = vand.u32 %v1262, 4294901760
    %v1573 = vsub.f32 %v1262, %v1572
    %1574 = vmatmul.f32.gmra.mxu0 %v1573
    %v1575 = vpop.f32.mrf.mxu0
    %v1576 = vadd.f32 %v1492, %v1575
    %v1577 = vand.u32 %v1263, 4294901760
    %v1578 = vsub.f32 %v1263, %v1577
    %1579 = vmatmul.f32.gmra.mxu0 %v1578
    %v1580 = vpop.f32.mrf.mxu0
    %v1581 = vadd.f32 %v1496, %v1580
    %v1582 = vand.u32 %v1264, 4294901760
    %v1583 = vsub.f32 %v1264, %v1582
    %1584 = vmatmul.f32.gmra.mxu0 %v1583
    %v1585 = vpop.f32.mrf.mxu0
    %v1586 = vadd.f32 %v1500, %v1585
    %v1587 = vand.u32 %v1265, 4294901760
    %v1588 = vsub.f32 %v1265, %v1587
    %1589 = vmatmul.f32.gmra.mxu0 %v1588
    %v1590 = vpop.f32.mrf.mxu0
    %v1591 = vadd.f32 %v1504, %v1590
    %v1592 = vand.u32 %v1266, 4294901760
    %v1593 = vsub.f32 %v1266, %v1592
    %1594 = vmatmul.f32.gmra.mxu0 %v1593
    %v1595 = vpop.f32.mrf.mxu0
    %v1596 = vadd.f32 %v1508, %v1595
    %v1597 = vand.u32 %v1267, 4294901760
    %v1598 = vsub.f32 %v1267, %v1597
    %1599 = vmatmul.f32.gmra.mxu0 %v1598
    %v1600 = vpop.f32.mrf.mxu0
    %v1601 = vadd.f32 %v1512, %v1600
    %1602 = vdwg.mxu0
    %v1603 = vand.u32 %v1283, 4294901760
    %1604 = vmatpush.msra.mxu0 %v1603
    %v1605 = vand.u32 %v1282, 4294901760
    %1606 = vmatpush.msra.mxu0 %v1605
    %v1607 = vand.u32 %v1281, 4294901760
    %1608 = vmatpush.msra.mxu0 %v1607
    %v1609 = vand.u32 %v1280, 4294901760
    %1610 = vmatpush.msra.mxu0 %v1609
    %v1611 = vand.u32 %v1279, 4294901760
    %1612 = vmatpush.msra.mxu0 %v1611
    %v1613 = vand.u32 %v1278, 4294901760
    %1614 = vmatpush.msra.mxu0 %v1613
    %v1615 = vand.u32 %v1277, 4294901760
    %1616 = vmatpush.msra.mxu0 %v1615
    %v1617 = vand.u32 %v1276, 4294901760
    %1618 = vmatpush.msra.mxu0 %v1617
    %v1619 = vand.u32 %v1275, 4294901760
    %1620 = vmatpush.msra.mxu0 %v1619
    %v1621 = vand.u32 %v1274, 4294901760
    %1622 = vmatpush.msra.mxu0 %v1621
    %v1623 = vand.u32 %v1273, 4294901760
    %1624 = vmatpush.msra.mxu0 %v1623
    %v1625 = vand.u32 %v1272, 4294901760
    %1626 = vmatpush.msra.mxu0 %v1625
    %v1627 = vand.u32 %v1271, 4294901760
    %1628 = vmatpush.msra.mxu0 %v1627
    %v1629 = vand.u32 %v1270, 4294901760
    %1630 = vmatpush.msra.mxu0 %v1629
    %v1631 = vand.u32 %v1269, 4294901760
    %1632 = vmatpush.msra.mxu0 %v1631
    %v1633 = vand.u32 %v1268, 4294901760
    %1634 = vmatpush.msra.mxu0 %v1633
    %v1635 = vand.u32 %v1260, 4294901760
    %v1636 = vsub.f32 %v1260, %v1635
    %v1637 = vand.u32 %v1636, 4294901760
    %1638 = vmatmul.f32.gmra.mxu0 %v1637
    %v1639 = vpop.f32.mrf.mxu0
    %v1640 = vadd.f32 %v1566, %v1639
    %v1641 = vand.u32 %v1261, 4294901760
    %v1642 = vsub.f32 %v1261, %v1641
    %v1643 = vand.u32 %v1642, 4294901760
    %1644 = vmatmul.f32.gmra.mxu0 %v1643
    %v1645 = vpop.f32.mrf.mxu0
    %v1646 = vadd.f32 %v1571, %v1645
    %v1647 = vand.u32 %v1262, 4294901760
    %v1648 = vsub.f32 %v1262, %v1647
    %v1649 = vand.u32 %v1648, 4294901760
    %1650 = vmatmul.f32.gmra.mxu0 %v1649
    %v1651 = vpop.f32.mrf.mxu0
    %v1652 = vadd.f32 %v1576, %v1651
    %v1653 = vand.u32 %v1263, 4294901760
    %v1654 = vsub.f32 %v1263, %v1653
    %v1655 = vand.u32 %v1654, 4294901760
    %1656 = vmatmul.f32.gmra.mxu0 %v1655
    %v1657 = vpop.f32.mrf.mxu0
    %v1658 = vadd.f32 %v1581, %v1657
    %v1659 = vand.u32 %v1264, 4294901760
    %v1660 = vsub.f32 %v1264, %v1659
    %v1661 = vand.u32 %v1660, 4294901760
    %1662 = vmatmul.f32.gmra.mxu0 %v1661
    %v1663 = vpop.f32.mrf.mxu0
    %v1664 = vadd.f32 %v1586, %v1663
    %v1665 = vand.u32 %v1265, 4294901760
    %v1666 = vsub.f32 %v1265, %v1665
    %v1667 = vand.u32 %v1666, 4294901760
    %1668 = vmatmul.f32.gmra.mxu0 %v1667
    %v1669 = vpop.f32.mrf.mxu0
    %v1670 = vadd.f32 %v1591, %v1669
    %v1671 = vand.u32 %v1266, 4294901760
    %v1672 = vsub.f32 %v1266, %v1671
    %v1673 = vand.u32 %v1672, 4294901760
    %1674 = vmatmul.f32.gmra.mxu0 %v1673
    %v1675 = vpop.f32.mrf.mxu0
    %v1676 = vadd.f32 %v1596, %v1675
    %v1677 = vand.u32 %v1267, 4294901760
    %v1678 = vsub.f32 %v1267, %v1677
    %v1679 = vand.u32 %v1678, 4294901760
    %1680 = vmatmul.f32.gmra.mxu0 %v1679
    %v1681 = vpop.f32.mrf.mxu0
    %v1682 = vadd.f32 %v1601, %v1681
    %1683 = vdwg.mxu0
    %v1684 = vand.u32 %v1283, 4294901760
    %v1685 = vsub.f32 %v1283, %v1684
    %v1686 = vand.u32 %v1685, 4294901760
    %1687 = vmatpush.msra.mxu0 %v1686
    %v1688 = vand.u32 %v1282, 4294901760
    %v1689 = vsub.f32 %v1282, %v1688
    %v1690 = vand.u32 %v1689, 4294901760
    %1691 = vmatpush.msra.mxu0 %v1690
    %v1692 = vand.u32 %v1281, 4294901760
    %v1693 = vsub.f32 %v1281, %v1692
    %v1694 = vand.u32 %v1693, 4294901760
    %1695 = vmatpush.msra.mxu0 %v1694
    %v1696 = vand.u32 %v1280, 4294901760
    %v1697 = vsub.f32 %v1280, %v1696
    %v1698 = vand.u32 %v1697, 4294901760
    %1699 = vmatpush.msra.mxu0 %v1698
    %v1700 = vand.u32 %v1279, 4294901760
    %v1701 = vsub.f32 %v1279, %v1700
    %v1702 = vand.u32 %v1701, 4294901760
    %1703 = vmatpush.msra.mxu0 %v1702
    %v1704 = vand.u32 %v1278, 4294901760
    %v1705 = vsub.f32 %v1278, %v1704
    %v1706 = vand.u32 %v1705, 4294901760
    %1707 = vmatpush.msra.mxu0 %v1706
    %v1708 = vand.u32 %v1277, 4294901760
    %v1709 = vsub.f32 %v1277, %v1708
    %v1710 = vand.u32 %v1709, 4294901760
    %1711 = vmatpush.msra.mxu0 %v1710
    %v1712 = vand.u32 %v1276, 4294901760
    %v1713 = vsub.f32 %v1276, %v1712
    %v1714 = vand.u32 %v1713, 4294901760
    %1715 = vmatpush.msra.mxu0 %v1714
    %v1716 = vand.u32 %v1275, 4294901760
    %v1717 = vsub.f32 %v1275, %v1716
    %v1718 = vand.u32 %v1717, 4294901760
    %1719 = vmatpush.msra.mxu0 %v1718
    %v1720 = vand.u32 %v1274, 4294901760
    %v1721 = vsub.f32 %v1274, %v1720
    %v1722 = vand.u32 %v1721, 4294901760
    %1723 = vmatpush.msra.mxu0 %v1722
    %v1724 = vand.u32 %v1273, 4294901760
    %v1725 = vsub.f32 %v1273, %v1724
    %v1726 = vand.u32 %v1725, 4294901760
    %1727 = vmatpush.msra.mxu0 %v1726
    %v1728 = vand.u32 %v1272, 4294901760
    %v1729 = vsub.f32 %v1272, %v1728
    %v1730 = vand.u32 %v1729, 4294901760
    %1731 = vmatpush.msra.mxu0 %v1730
    %v1732 = vand.u32 %v1271, 4294901760
    %v1733 = vsub.f32 %v1271, %v1732
    %v1734 = vand.u32 %v1733, 4294901760
    %1735 = vmatpush.msra.mxu0 %v1734
    %v1736 = vand.u32 %v1270, 4294901760
    %v1737 = vsub.f32 %v1270, %v1736
    %v1738 = vand.u32 %v1737, 4294901760
    %1739 = vmatpush.msra.mxu0 %v1738
    %v1740 = vand.u32 %v1269, 4294901760
    %v1741 = vsub.f32 %v1269, %v1740
    %v1742 = vand.u32 %v1741, 4294901760
    %1743 = vmatpush.msra.mxu0 %v1742
    %v1744 = vand.u32 %v1268, 4294901760
    %v1745 = vsub.f32 %v1268, %v1744
    %v1746 = vand.u32 %v1745, 4294901760
    %1747 = vmatpush.msra.mxu0 %v1746
    %v1748 = vand.u32 %v1260, 4294901760
    %1749 = vmatmul.f32.gmra.mxu0 %v1748
    %v1750 = vpop.f32.mrf.mxu0
    %v1751 = vadd.f32 %v1640, %v1750
    %v1752 = vand.u32 %v1261, 4294901760
    %1753 = vmatmul.f32.gmra.mxu0 %v1752
    %v1754 = vpop.f32.mrf.mxu0
    %v1755 = vadd.f32 %v1646, %v1754
    %v1756 = vand.u32 %v1262, 4294901760
    %1757 = vmatmul.f32.gmra.mxu0 %v1756
    %v1758 = vpop.f32.mrf.mxu0
    %v1759 = vadd.f32 %v1652, %v1758
    %v1760 = vand.u32 %v1263, 4294901760
    %1761 = vmatmul.f32.gmra.mxu0 %v1760
    %v1762 = vpop.f32.mrf.mxu0
    %v1763 = vadd.f32 %v1658, %v1762
    %v1764 = vand.u32 %v1264, 4294901760
    %1765 = vmatmul.f32.gmra.mxu0 %v1764
    %v1766 = vpop.f32.mrf.mxu0
    %v1767 = vadd.f32 %v1664, %v1766
    %v1768 = vand.u32 %v1265, 4294901760
    %1769 = vmatmul.f32.gmra.mxu0 %v1768
    %v1770 = vpop.f32.mrf.mxu0
    %v1771 = vadd.f32 %v1670, %v1770
    %v1772 = vand.u32 %v1266, 4294901760
    %1773 = vmatmul.f32.gmra.mxu0 %v1772
    %v1774 = vpop.f32.mrf.mxu0
    %v1775 = vadd.f32 %v1676, %v1774
    %v1776 = vand.u32 %v1267, 4294901760
    %1777 = vmatmul.f32.gmra.mxu0 %v1776
    %v1778 = vpop.f32.mrf.mxu0
    %v1779 = vadd.f32 %v1682, %v1778
    %1780 = vdwg.mxu0
    %v1781 = vand.u32 %v1283, 4294901760
    %1782 = vmatpush.msra.mxu0 %v1781
    %v1783 = vand.u32 %v1282, 4294901760
    %1784 = vmatpush.msra.mxu0 %v1783
    %v1785 = vand.u32 %v1281, 4294901760
    %1786 = vmatpush.msra.mxu0 %v1785
    %v1787 = vand.u32 %v1280, 4294901760
    %1788 = vmatpush.msra.mxu0 %v1787
    %v1789 = vand.u32 %v1279, 4294901760
    %1790 = vmatpush.msra.mxu0 %v1789
    %v1791 = vand.u32 %v1278, 4294901760
    %1792 = vmatpush.msra.mxu0 %v1791
    %v1793 = vand.u32 %v1277, 4294901760
    %1794 = vmatpush.msra.mxu0 %v1793
    %v1795 = vand.u32 %v1276, 4294901760
    %1796 = vmatpush.msra.mxu0 %v1795
    %v1797 = vand.u32 %v1275, 4294901760
    %1798 = vmatpush.msra.mxu0 %v1797
    %v1799 = vand.u32 %v1274, 4294901760
    %1800 = vmatpush.msra.mxu0 %v1799
    %v1801 = vand.u32 %v1273, 4294901760
    %1802 = vmatpush.msra.mxu0 %v1801
    %v1803 = vand.u32 %v1272, 4294901760
    %1804 = vmatpush.msra.mxu0 %v1803
    %v1805 = vand.u32 %v1271, 4294901760
    %1806 = vmatpush.msra.mxu0 %v1805
    %v1807 = vand.u32 %v1270, 4294901760
    %1808 = vmatpush.msra.mxu0 %v1807
    %v1809 = vand.u32 %v1269, 4294901760
    %1810 = vmatpush.msra.mxu0 %v1809
    %v1811 = vand.u32 %v1268, 4294901760
    %1812 = vmatpush.msra.mxu0 %v1811
    %v1813 = vand.u32 %v1260, 4294901760
    %1814 = vmatmul.f32.gmra.mxu0 %v1813
    %v1815 = vpop.f32.mrf.mxu0
    %v1816 = vadd.f32 %v1751, %v1815
    %v1817 = vand.u32 %v1261, 4294901760
    %1818 = vmatmul.f32.gmra.mxu0 %v1817
    %v1819 = vpop.f32.mrf.mxu0
    %v1820 = vadd.f32 %v1755, %v1819
    %v1821 = vand.u32 %v1262, 4294901760
    %1822 = vmatmul.f32.gmra.mxu0 %v1821
    %v1823 = vpop.f32.mrf.mxu0
    %v1824 = vadd.f32 %v1759, %v1823
    %v1825 = vand.u32 %v1263, 4294901760
    %1826 = vmatmul.f32.gmra.mxu0 %v1825
    %v1827 = vpop.f32.mrf.mxu0
    %v1828 = vadd.f32 %v1763, %v1827
    %v1829 = vand.u32 %v1264, 4294901760
    %1830 = vmatmul.f32.gmra.mxu0 %v1829
    %v1831 = vpop.f32.mrf.mxu0
    %v1832 = vadd.f32 %v1767, %v1831
    %v1833 = vand.u32 %v1265, 4294901760
    %1834 = vmatmul.f32.gmra.mxu0 %v1833
    %v1835 = vpop.f32.mrf.mxu0
    %v1836 = vadd.f32 %v1771, %v1835
    %v1837 = vand.u32 %v1266, 4294901760
    %1838 = vmatmul.f32.gmra.mxu0 %v1837
    %v1839 = vpop.f32.mrf.mxu0
    %v1840 = vadd.f32 %v1775, %v1839
    %v1841 = vand.u32 %v1267, 4294901760
    %1842 = vmatmul.f32.gmra.mxu0 %v1841
    %v1843 = vpop.f32.mrf.mxu0
    %v1844 = vadd.f32 %v1779, %v1843
    %1845 = vdwg.mxu0
    %1846 = vst [vmem:[#allocation9] sm:$0xff] %v1816
    %1847 = vst [vmem:[#allocation9 + $0x8] sm:$0xff] %v1820
    %1848 = vst [vmem:[#allocation9 + $0x10] sm:$0xff] %v1824
    %1849 = vst [vmem:[#allocation9 + $0x18] sm:$0xff] %v1828
    %1850 = vst [vmem:[#allocation9 + $0x20] sm:$0xff] %v1832
    %1851 = vst [vmem:[#allocation9 + $0x28] sm:$0xff] %v1836
    %1852 = vst [vmem:[#allocation9 + $0x30] sm:$0xff] %v1840
    %1853 = vst [vmem:[#allocation9 + $0x38] sm:$0xff] %v1844
    // Predicated region
    $region38: #{tpu_custom_call.1} parent=1 // pred_check
      _
    $region39: #{tpu_custom_call.1} parent=1 // pred_check_branch
      %1855 = sbr.rel (0) target = $region41
    $region40: #{tpu_custom_call.1} parent=1 // pred_region
      %1857 = vsyncadd [#allocation6], 0
      %s1858 = sshll.u32 [#allocation9], 4
      %s1859 = int_to_ptr.vmem [resolvable:$true] %s1858
      %s1860 = sshll.u32 %s7, 4
      %s1861 = int_to_ptr.hbm [resolvable:$true] %s1860
      %1866 = dma.vmem_to_hbm [thread:$0]  %s1859, 1024, %s1861, [#allocation6], 128, 128, 8
    $region41: #{tpu_custom_call.1} parent=1 // pred_fallthru
      _
    // Predicated region
    $region42: #{tpu_custom_call.1} parent=1 // pred_check
      _
    $region43: #{tpu_custom_call.1} parent=1 // pred_check_branch
      %1868 = sbr.rel (0) target = $region45
    $region44: #{tpu_custom_call.1} parent=1 // pred_region
      %1870 = dma.done [#allocation6], 1024
    $region45: #{tpu_custom_call.1} parent=1 // pred_fallthru
      _
    %1871 = vsyncpa [#allocation5], 1
    %1872 = vsyncpa [#allocation8], 1
    %1873 = vsyncpa [#allocation6], 1

</llo_original>
